<compile_context>
chip_gen: v6e
topology: v6e:2x2x1
jax: 0.10.0
libtpu: 0.0.40
codegen_flags: <defaults>
</compile_context>

<pallas_src>
import numpy as np
import jax
import jax.numpy as jnp
from jax import lax
from jax.experimental import pallas as pl
from jax.experimental.pallas import tpu as pltpu

HIDDEN = 32        # stand-in for bert hidden_size (768 in the real model)
N_EMOTION = 7
N_CAUSE = 2
N_EXPERT = 2
GUIDING_LAMBDA = 0.0
VOCAB = 64

EXPERT_H = 256                        # hidden width of each expert MLP
FEAT_REAL = HIDDEN + N_EMOTION + 1    # 40: [pooled | emotion | speaker]
FEAT_PAD = 128                        # lane-dense per-utterance feature slab
GATE_OFF = N_EXPERT * EXPERT_H        # 512: gate logits live in cols 512..513
W1_COLS = GATE_OFF + 128              # 640: [expert0 | expert1 | gate | 0pad]
OUT_PAD = 128                         # lane-dense cause output slab
SPK_COL = HIDDEN + N_EMOTION          # 39: speaker lane inside the feat slab

UTT_TILE_MAX = 256                    # utterance-stage row tile
PAIR_TILE_MAX = 512                   # pair-stage row tile


def _round_up(x, m):
    return (x + m - 1) // m * m


# ----------------------------------------------------------------------------
# Kernel 1 — utterance stage (runs once, row-tiled, 'parallel'):
#   pooled = tanh(x @ Wp + bp)
#   feat   = [pooled | pooled@We + be | speaker | 0]     (lane-dense 128 slab)
# ----------------------------------------------------------------------------
def utterance_kernel(x_ref, spk_ref, wp_ref, bp_ref, wcat_ref, bcat_ref,
                     utt_f32_ref, utt_bf16_ref):
    xb = x_ref[...].astype(jnp.bfloat16)
    pooled = jnp.tanh(
        jnp.dot(xb, wp_ref[...], preferred_element_type=jnp.float32)
        + bp_ref[...])
    feat = (jnp.dot(pooled.astype(jnp.bfloat16), wcat_ref[...],
                    preferred_element_type=jnp.float32) + bcat_ref[...])
    # drop the speaker id into its lane (no 128-wide speaker-slab input)
    lane = lax.broadcasted_iota(jnp.int32, feat.shape, 1)
    feat = jnp.where(lane == SPK_COL, spk_ref[...], feat)
    utt_f32_ref[...] = feat                          # f32 slab (emotion head)
    utt_bf16_ref[...] = feat.astype(jnp.bfloat16)    # bf16 slab (pair stage)


# ----------------------------------------------------------------------------
# Kernel 2 — pair gather + gating + 2-expert MoE (row-tiled over pairs):
#   sel_t/sel_e = one-hot(index) built in-kernel from int32 index columns
#   first/second = sel @ feat                            (in-kernel gather)
#   h      = first @ W1a + second @ W1b + b1s            (experts + gate)
#   cause  = (g0*h0) @ W2a + (g1*h1) @ W2b + g0*b2_0 + g1*b2_1
# ----------------------------------------------------------------------------
def pair_moe_kernel(tidx_ref, eidx_ref, feat_ref,
                    w1a_ref, w1b_ref, b1s_ref, w2a_ref, w2b_ref, b2s_ref,
                    cause_ref):
    tile = tidx_ref.shape[0]
    r_utt = feat_ref.shape[0]

    # in-kernel one-hot gather (bf16 is exact for 0/1) — no HBM select matrices
    utt_ids = lax.broadcasted_iota(jnp.int32, (tile, r_utt), 1)
    sel_t = jnp.where(utt_ids == tidx_ref[...], 1.0, 0.0).astype(jnp.bfloat16)
    sel_e = jnp.where(utt_ids == eidx_ref[...], 1.0, 0.0).astype(jnp.bfloat16)

    feat = feat_ref[...]                                     # (r_utt, 128) bf16
    first = jnp.dot(sel_t, feat,
                    preferred_element_type=jnp.float32).astype(jnp.bfloat16)
    second = jnp.dot(sel_e, feat,
                     preferred_element_type=jnp.float32).astype(jnp.bfloat16)

    # split-K stacked first layer: [expert0 | expert1 | gate] in one slab
    h = (jnp.dot(first, w1a_ref[...], preferred_element_type=jnp.float32)
         + jnp.dot(second, w1b_ref[...], preferred_element_type=jnp.float32)
         + b1s_ref[...])                                     # (tile, 640) f32

    g0 = h[:, GATE_OFF:GATE_OFF + 1]                         # gate logit e0
    g1 = h[:, GATE_OFF + 1:GATE_OFF + 2]                     # gate logit e1
    h0 = (g0 * h[:, 0:EXPERT_H]).astype(jnp.bfloat16)
    h1 = (g1 * h[:, EXPERT_H:2 * EXPERT_H]).astype(jnp.bfloat16)

    b2 = b2s_ref[...]                                        # (2, 128) f32
    cause = (jnp.dot(h0, w2a_ref[...], preferred_element_type=jnp.float32)
             + jnp.dot(h1, w2b_ref[...], preferred_element_type=jnp.float32)
             + g0 * b2[0:1, :] + g1 * b2[1:2, :])
    cause_ref[...] = cause                                   # full 128-lane vst


# ----------------------------------------------------------------------------
# Parameter init (deterministic, synthetic) — same layout as the reference
# ----------------------------------------------------------------------------
def init_params(key):
    H = HIDDEN
    F = 2 * (H + N_EMOTION + 1)
    ks = jax.random.split(key, 10)

    def lin(k, fan_in, shape):
        return (jax.random.normal(k, shape, jnp.float32)
                * (1.0 / jnp.sqrt(fan_in)))

    return dict(
        embed=lin(ks[0], H, (VOCAB, H)),
        w_pool=lin(ks[1], H, (H, H)),
        b_pool=jnp.zeros((1, H), jnp.float32),
        w_emo=lin(ks[2], H, (H, N_EMOTION)),
        b_emo=jnp.zeros((1, N_EMOTION), jnp.float32),
        w_gate=lin(ks[3], F, (F, N_EXPERT)),
        b_gate=jnp.zeros((1, N_EXPERT), jnp.float32),
        w1=lin(ks[4], F, (N_EXPERT, F, EXPERT_H)),
        b1=jnp.zeros((N_EXPERT, 1, EXPERT_H), jnp.float32),
        w2=lin(ks[5], EXPERT_H, (N_EXPERT, EXPERT_H, N_CAUSE)),
        b2=jnp.zeros((N_EXPERT, 1, N_CAUSE), jnp.float32),
    )


# ----------------------------------------------------------------------------
# Weight packing (wrapper-side layout plumbing, weights cast to bf16)
# ----------------------------------------------------------------------------
def _pack_weights(params):
    H = HIDDEN
    bf = jnp.bfloat16

    # [Identity | We | 0] so the feat slab comes out of one matmul.
    wcat = jnp.zeros((H, FEAT_PAD), jnp.float32)
    wcat = wcat.at[:, :H].set(jnp.eye(H, dtype=jnp.float32))
    wcat = wcat.at[:, H:H + N_EMOTION].set(params['w_emo'])
    bcat = jnp.zeros((1, FEAT_PAD), jnp.float32)
    bcat = bcat.at[:, H:H + N_EMOTION].set(params['b_emo'])

    # stacked first-layer weights, split by pair half (no lane concat needed):
    # cols [0:256]=W1_e0, [256:512]=W1_e1, [512:514]=W_gate; rows 0..39 real.
    w1a = jnp.zeros((FEAT_PAD, W1_COLS), jnp.float32)   # first pair half
    w1b = jnp.zeros((FEAT_PAD, W1_COLS), jnp.float32)   # second pair half
    b1s = jnp.zeros((1, W1_COLS), jnp.float32)
    for e in range(N_EXPERT):
        c0, c1 = e * EXPERT_H, (e + 1) * EXPERT_H
        w1a = w1a.at[:FEAT_REAL, c0:c1].set(params['w1'][e][:FEAT_REAL])
        w1b = w1b.at[:FEAT_REAL, c0:c1].set(params['w1'][e][FEAT_REAL:])
        b1s = b1s.at[:, c0:c1].set(params['b1'][e])
    w1a = w1a.at[:FEAT_REAL, GATE_OFF:GATE_OFF + N_EXPERT].set(
        params['w_gate'][:FEAT_REAL])
    w1b = w1b.at[:FEAT_REAL, GATE_OFF:GATE_OFF + N_EXPERT].set(
        params['w_gate'][FEAT_REAL:])
    b1s = b1s.at[:, GATE_OFF:GATE_OFF + N_EXPERT].set(params['b_gate'])

    # per-expert second-layer weights + output biases (lane-dense 128 slabs).
    w2a = jnp.zeros((EXPERT_H, OUT_PAD), jnp.float32)
    w2b = jnp.zeros((EXPERT_H, OUT_PAD), jnp.float32)
    w2a = w2a.at[:, :N_CAUSE].set(params['w2'][0])
    w2b = w2b.at[:, :N_CAUSE].set(params['w2'][1])
    b2s = jnp.zeros((N_EXPERT, OUT_PAD), jnp.float32)
    for e in range(N_EXPERT):
        b2s = b2s.at[e:e + 1, :N_CAUSE].set(params['b2'][e])

    return dict(
        w_pool=params['w_pool'].astype(bf), b_pool=params['b_pool'],
        wcat=wcat.astype(bf), bcat=bcat,
        w1a=w1a.astype(bf), w1b=w1b.astype(bf), b1s=b1s,
        w2a=w2a.astype(bf), w2b=w2b.astype(bf), b2s=b2s)


def _vmem_limit(est_bytes):
    return int(min(max(4 * est_bytes, 32 << 20), 64 << 20))


# ----------------------------------------------------------------------------
# Forward pass (glue in JAX, dense compute in two Pallas kernels)
# ----------------------------------------------------------------------------
def guided_moe_forward(params, input_ids, attention_mask, token_type_ids,
                       speaker_ids):
    B, D, S = input_ids.shape
    H = HIDDEN
    del token_type_ids  # consumed by the real BERT; stand-in ignores it

    # --- synthetic BERT pooled output: embed + masked mean pool (glue) ---
    flat_ids = input_ids.reshape(-1, S)
    flat_mask = attention_mask.reshape(-1, S).astype(jnp.float32)
    tok = params['embed'][flat_ids]                               # (B*D, S, H)
    denom = jnp.maximum(flat_mask.sum(axis=-1, keepdims=True), 1.0)
    x = (tok * flat_mask[..., None]).sum(axis=1) / denom          # (B*D, H)

    R_utt = B * D
    utt_tile = min(_round_up(R_utt, 8), UTT_TILE_MAX)
    R_utt_pad = _round_up(R_utt, utt_tile)
    n_utt_tiles = R_utt_pad // utt_tile
    if R_utt_pad != R_utt:
        x = jnp.pad(x, ((0, R_utt_pad - R_utt), (0, 0)))
    spk = jnp.zeros((R_utt_pad, 1), jnp.float32).at[:R_utt, 0].set(
        speaker_ids.reshape(-1).astype(jnp.float32))

    packed = _pack_weights(params)

    full = lambda i: (0, 0)
    tiled = lambda i: (i, 0)

    # ---------------- Call 1: utterance stage (runs once) -----------------
    utt_inputs = (x, spk, packed['w_pool'], packed['b_pool'],
                  packed['wcat'], packed['bcat'])
    utt_in_specs = [
        pl.BlockSpec((utt_tile, H), tiled),          # x
        pl.BlockSpec((utt_tile, 1), tiled),          # speaker column
        pl.BlockSpec((H, H), full),                  # w_pool (bf16)
        pl.BlockSpec((1, H), full),                  # b_pool
        pl.BlockSpec((H, FEAT_PAD), full),           # wcat ([I | We | 0], bf16)
        pl.BlockSpec((1, FEAT_PAD), full),           # bcat
    ]
    utt_out_specs = (pl.BlockSpec((utt_tile, FEAT_PAD), tiled),
                     pl.BlockSpec((utt_tile, FEAT_PAD), tiled))
    utt_out_shape = (jax.ShapeDtypeStruct((R_utt_pad, FEAT_PAD), jnp.float32),
                     jax.ShapeDtypeStruct((R_utt_pad, FEAT_PAD), jnp.bfloat16))

    utt_est = (2 * (utt_tile * (H + 1) * 4 + utt_tile * FEAT_PAD * 6)
               + (H * H + H * FEAT_PAD) * 2 + (H + FEAT_PAD) * 4)
    utt_cost = pl.CostEstimate(
        flops=int(2 * R_utt_pad * (H * H + H * FEAT_PAD)),
        transcendentals=int(R_utt_pad * H),
        bytes_accessed=int(4 * R_utt_pad * (H + 1 + FEAT_PAD)
                           + 2 * R_utt_pad * FEAT_PAD
                           + 2 * (H * H + H * FEAT_PAD) + 4 * (H + FEAT_PAD)))

    utt_f32, utt_bf16 = pl.pallas_call(
        utterance_kernel,
        out_shape=utt_out_shape,
        grid_spec=pltpu.PrefetchScalarGridSpec(
            num_scalar_prefetch=0, grid=(n_utt_tiles,),
            in_specs=utt_in_specs, out_specs=utt_out_specs),
        compiler_params=pltpu.CompilerParams(
            dimension_semantics=("parallel",),
            vmem_limit_bytes=_vmem_limit(utt_est)),
        cost_estimate=utt_cost,
    )(*utt_inputs)

    # ---------------- pair index columns (tiny int32 constants) -----------
    t_list, e_list = [], []
    for end_t in range(D):
        for t in range(end_t + 1):
            t_list.append(t)
            e_list.append(end_t)
    P = len(t_list)
    R_pair = B * P
    pair_tile = min(_round_up(R_pair, 8), PAIR_TILE_MAX)
    R_pair_pad = _round_up(R_pair, pair_tile)
    n_pair_tiles = R_pair_pad // pair_tile

    tidx_np = np.zeros((R_pair_pad, 1), np.int32)
    eidx_np = np.zeros((R_pair_pad, 1), np.int32)
    for b in range(B):
        base = b * P
        for p in range(P):
            tidx_np[base + p, 0] = b * D + t_list[p]
            eidx_np[base + p, 0] = b * D + e_list[p]
    tidx = jnp.asarray(tidx_np)
    eidx = jnp.asarray(eidx_np)

    # ---------------- Call 2: pair gather + gating + MoE ------------------
    pair_inputs = (tidx, eidx, utt_bf16,
                   packed['w1a'], packed['w1b'], packed['b1s'],
                   packed['w2a'], packed['w2b'], packed['b2s'])
    pair_in_specs = [
        pl.BlockSpec((pair_tile, 1), tiled),          # t index column
        pl.BlockSpec((pair_tile, 1), tiled),          # end_t index column
        pl.BlockSpec((R_utt_pad, FEAT_PAD), full),    # feat slab (bf16, resident)
        pl.BlockSpec((FEAT_PAD, W1_COLS), full),      # W1 first-half  + gate
        pl.BlockSpec((FEAT_PAD, W1_COLS), full),      # W1 second-half + gate
        pl.BlockSpec((1, W1_COLS), full),             # b1 + b_gate
        pl.BlockSpec((EXPERT_H, OUT_PAD), full),      # W2 expert 0
        pl.BlockSpec((EXPERT_H, OUT_PAD), full),      # W2 expert 1
        pl.BlockSpec((N_EXPERT, OUT_PAD), full),      # b2 per expert
    ]
    pair_out_spec = pl.BlockSpec((pair_tile, OUT_PAD), tiled)
    pair_out_shape = jax.ShapeDtypeStruct((R_pair_pad, OUT_PAD), jnp.float32)

    weight_bytes = (2 * FEAT_PAD * W1_COLS * 2 + W1_COLS * 4
                    + 2 * EXPERT_H * OUT_PAD * 2 + N_EXPERT * OUT_PAD * 4)
    pair_est = (2 * (2 * pair_tile * 4 + pair_tile * OUT_PAD * 4)
                + R_utt_pad * FEAT_PAD * 2 + weight_bytes
                + pair_tile * (2 * R_utt_pad * 2 + W1_COLS * 4
                               + 2 * FEAT_PAD * 4))
    pair_cost = pl.CostEstimate(
        flops=int(2 * R_pair_pad * (2 * R_utt_pad * FEAT_PAD
                                    + 2 * FEAT_PAD * W1_COLS
                                    + 2 * EXPERT_H * OUT_PAD)),
        transcendentals=0,
        bytes_accessed=int(2 * R_pair_pad * 4 + R_utt_pad * FEAT_PAD * 2
                           + weight_bytes + R_pair_pad * OUT_PAD * 4))

    cause_slab = pl.pallas_call(
        pair_moe_kernel,
        out_shape=pair_out_shape,
        grid_spec=pltpu.PrefetchScalarGridSpec(
            num_scalar_prefetch=0, grid=(n_pair_tiles,),
            in_specs=pair_in_specs, out_specs=pair_out_spec),
        compiler_params=pltpu.CompilerParams(
            dimension_semantics=("parallel",),   # pair tiles independent (v7x 2 TCs)
            vmem_limit_bytes=_vmem_limit(pair_est)),
        cost_estimate=pair_cost,
    )(*pair_inputs)

    # wrapper-side slicing of the lane-dense slabs (pure layout, no compute)
    emotion_pred = utt_f32[:R_utt, H:H + N_EMOTION]            # (B*D, 7)
    cause_pred = cause_slab[:R_pair, :N_CAUSE]                 # (B*P, 2)
    return emotion_pred, cause_pred


# ----------------------------------------------------------------------------
# Pure-JAX reference (same math, straightforward f32 form) for validation
# ----------------------------------------------------------------------------
def _reference_forward(params, input_ids, attention_mask, token_type_ids,
                       speaker_ids):
    B, D, S = input_ids.shape
    del token_type_ids
    hi = jax.lax.Precision.HIGHEST
    flat_ids = input_ids.reshape(-1, S)
    flat_mask = attention_mask.reshape(-1, S).astype(jnp.float32)
    tok = params['embed'][flat_ids]
    denom = jnp.maximum(flat_mask.sum(axis=-1, keepdims=True), 1.0)
    x = (tok * flat_mask[..., None]).sum(axis=1) / denom
    pooled = jnp.tanh(jnp.dot(x, params['w_pool'], precision=hi)
                      + params['b_pool'])
    emotion = jnp.dot(pooled, params['w_emo'], precision=hi) + params['b_emo']
    concat = jnp.concatenate(
        [pooled, emotion, speaker_ids.reshape(-1, 1).astype(jnp.float32)],
        axis=1).reshape(B, D, -1)
    t_idx, e_idx = [], []
    for end_t in range(D):
        for t in range(end_t + 1):
            t_idx.append(t)
            e_idx.append(end_t)
    t_idx = jnp.asarray(t_idx, jnp.int32)
    e_idx = jnp.asarray(e_idx, jnp.int32)
    pair = jnp.concatenate([concat[:, t_idx], concat[:, e_idx]], axis=-1)
    pair = pair.reshape(-1, pair.shape[-1])
    gating = jnp.dot(pair, params['w_gate'], precision=hi) + params['b_gate']
    cause = jnp.zeros((pair.shape[0], N_CAUSE), jnp.float32)
    for e in range(N_EXPERT):
        h = jnp.dot(pair, params['w1'][e], precision=hi) + params['b1'][e]
        o = jnp.dot(h, params['w2'][e], precision=hi) + params['b2'][e]
        cause = cause + gating[:, e:e + 1] * o
    return emotion, cause


if __name__ == "__main__":
    key = jax.random.PRNGKey(0)
    k_param, k_ids, k_mask, k_spk = jax.random.split(key, 4)

    B, D, S = 2, 4, 8   # batch, max_doc_len, max_seq_len
    params = init_params(k_param)

    input_ids = jax.random.randint(k_ids, (B, D, S), 0, VOCAB, jnp.int32)
    lens = jax.random.randint(k_mask, (B, D), 3, S + 1, jnp.int32)
    attention_mask = (jnp.arange(S)[None, None, :] < lens[..., None]
                      ).astype(jnp.int32)
    token_type_ids = jnp.zeros((B, D, S), jnp.int32)
    speaker_ids = jax.random.randint(k_spk, (B, D), 0, 2, jnp.int32)

    emotion_pred, cause_pred = jax.jit(guided_moe_forward)(
        params, input_ids, attention_mask, token_type_ids, speaker_ids)
    jax.block_until_ready((emotion_pred, cause_pred))

    P = D * (D + 1) // 2
    assert emotion_pred.shape == (B * D, N_EMOTION)
    assert cause_pred.shape == (B * P, N_CAUSE)

    emo_ref, cause_ref = _reference_forward(
        params, input_ids, attention_mask, token_type_ids, speaker_ids)
    # bf16 matmul operands (f32 accumulate) -> slightly relaxed tolerances
    np.testing.assert_allclose(np.asarray(emotion_pred), np.asarray(emo_ref),
                               rtol=5e-2, atol=2e-2)
    np.testing.assert_allclose(np.asarray(cause_pred), np.asarray(cause_ref),
                               rtol=5e-2, atol=2e-2)
    print("KERNEL_OK")
</pallas_src>

<mosaic_0001>
module attributes {stable_mosaic.version = 11 : i64} {
  func.func @utterance_kernel(%arg0: i32, %arg1: memref<8x32xf32, #tpu.memory_space<vmem>>, %arg2: memref<8x1xf32, #tpu.memory_space<vmem>>, %arg3: memref<32x32xbf16, #tpu.memory_space<vmem>>, %arg4: memref<1x32xf32, #tpu.memory_space<vmem>>, %arg5: memref<32x128xbf16, #tpu.memory_space<vmem>>, %arg6: memref<1x128xf32, #tpu.memory_space<vmem>>, %arg7: memref<8x128xf32, #tpu.memory_space<vmem>>, %arg8: memref<8x128xbf16, #tpu.memory_space<vmem>>) attributes {dimension_semantics = [#tpu.dimension_semantics<parallel>], iteration_bounds = array<i64: 1>, scalar_prefetch = 0 : i64, scratch_operands = 0 : i64, tpu.core_type = #tpu.core_type<tc>, window_params = [{transform_indices = @transform_0, window_bounds = array<i64: 8, 32>}, {transform_indices = @transform_1, window_bounds = array<i64: 8, 1>}, {pipeline_mode = #tpu.pipeline_mode<synchronous>, transform_indices = @transform_2, window_bounds = array<i64: 32, 32>}, {pipeline_mode = #tpu.pipeline_mode<synchronous>, transform_indices = @transform_3, window_bounds = array<i64: 1, 32>}, {pipeline_mode = #tpu.pipeline_mode<synchronous>, transform_indices = @transform_4, window_bounds = array<i64: 32, 128>}, {pipeline_mode = #tpu.pipeline_mode<synchronous>, transform_indices = @transform_5, window_bounds = array<i64: 1, 128>}, {transform_indices = @transform_6, window_bounds = array<i64: 8, 128>}, {transform_indices = @transform_7, window_bounds = array<i64: 8, 128>}]} {
    %c0 = arith.constant 0 : index
    %c0_0 = arith.constant 0 : index
    %0 = vector.load %arg1[%c0, %c0_0] : memref<8x32xf32, #tpu.memory_space<vmem>>, vector<8x32xf32>
    %1 = arith.truncf %0 : vector<8x32xf32> to vector<8x32xbf16>
    %c0_1 = arith.constant 0 : index
    %c0_2 = arith.constant 0 : index
    %2 = vector.load %arg3[%c0_1, %c0_2] : memref<32x32xbf16, #tpu.memory_space<vmem>>, vector<32x32xbf16>
    %cst = arith.constant dense<0.000000e+00> : vector<8x32xf32>
    %3 = tpu.matmul %1, %2, %cst {dimension_numbers = #tpu.dot_dimension_numbers<[1], [0], [0], [1], [0, 0, 1, 1], [], []>} : vector<8x32xbf16>, vector<32x32xbf16>, vector<8x32xf32> -> vector<8x32xf32>
    %c0_3 = arith.constant 0 : index
    %c0_4 = arith.constant 0 : index
    %4 = vector.load %arg4[%c0_3, %c0_4] : memref<1x32xf32, #tpu.memory_space<vmem>>, vector<1x32xf32>
    %5 = vector.broadcast %4 : vector<1x32xf32> to vector<8x32xf32>
    %6 = arith.addf %3, %5 : vector<8x32xf32>
    %7 = math.tanh %6 : vector<8x32xf32>
    %8 = arith.truncf %7 : vector<8x32xf32> to vector<8x32xbf16>
    %c0_5 = arith.constant 0 : index
    %c0_6 = arith.constant 0 : index
    %9 = vector.load %arg5[%c0_5, %c0_6] : memref<32x128xbf16, #tpu.memory_space<vmem>>, vector<32x128xbf16>
    %cst_7 = arith.constant dense<0.000000e+00> : vector<8x128xf32>
    %10 = tpu.matmul %8, %9, %cst_7 {dimension_numbers = #tpu.dot_dimension_numbers<[1], [0], [0], [1], [0, 0, 1, 1], [], []>} : vector<8x32xbf16>, vector<32x128xbf16>, vector<8x128xf32> -> vector<8x128xf32>
    %c0_8 = arith.constant 0 : index
    %c0_9 = arith.constant 0 : index
    %11 = vector.load %arg6[%c0_8, %c0_9] : memref<1x128xf32, #tpu.memory_space<vmem>>, vector<1x128xf32>
    %12 = vector.broadcast %11 : vector<1x128xf32> to vector<8x128xf32>
    %13 = arith.addf %10, %12 : vector<8x128xf32>
    %14 = tpu.iota {dimensions = array<i32: 1>} : vector<8x128xi32>
    %c39_i32 = arith.constant 39 : i32
    %15 = vector.broadcast %c39_i32 : i32 to vector<8x128xi32>
    %16 = arith.cmpi eq, %14, %15 : vector<8x128xi32>
    %c0_10 = arith.constant 0 : index
    %c0_11 = arith.constant 0 : index
    %17 = vector.load %arg2[%c0_10, %c0_11] : memref<8x1xf32, #tpu.memory_space<vmem>>, vector<8x1xf32>
    %18 = vector.shape_cast %17 : vector<8x1xf32> to vector<8x1xf32>
    %19 = vector.broadcast %18 : vector<8x1xf32> to vector<8x128xf32>
    %20 = arith.select %16, %19, %13 : vector<8x128xi1>, vector<8x128xf32>
    %c0_12 = arith.constant 0 : index
    %c0_13 = arith.constant 0 : index
    %21 = vector.load %arg7[%c0_12, %c0_13] : memref<8x128xf32, #tpu.memory_space<vmem>>, vector<8x128xf32>
    tpu.vector_store %arg7[%c0_12, %c0_13], %20 {strides = array<i32>} : memref<8x128xf32, #tpu.memory_space<vmem>>, vector<8x128xf32>,
    %22 = arith.truncf %20 : vector<8x128xf32> to vector<8x128xbf16>
    %c0_14 = arith.constant 0 : index
    %c0_15 = arith.constant 0 : index
    %23 = vector.load %arg8[%c0_14, %c0_15] : memref<8x128xbf16, #tpu.memory_space<vmem>>, vector<8x128xbf16>
    tpu.vector_store %arg8[%c0_14, %c0_15], %22 {strides = array<i32>} : memref<8x128xbf16, #tpu.memory_space<vmem>>, vector<8x128xbf16>,
    return
  }
  func.func @transform_0(%arg0: i32) -> (i32, i32) {
    %c0_i32 = arith.constant 0 : i32
    %c0_i32_0 = arith.constant 0 : i32
    return %arg0, %c0_i32 : i32, i32
  }
  func.func @transform_1(%arg0: i32) -> (i32, i32) {
    %c0_i32 = arith.constant 0 : i32
    %c0_i32_0 = arith.constant 0 : i32
    return %arg0, %c0_i32 : i32, i32
  }
  func.func @transform_2(%arg0: i32) -> (i32, i32) {
    %c0_i32 = arith.constant 0 : i32
    %c0_i32_0 = arith.constant 0 : i32
    %c0_i32_1 = arith.constant 0 : i32
    return %c0_i32, %c0_i32_0 : i32, i32
  }
  func.func @transform_3(%arg0: i32) -> (i32, i32) {
    %c0_i32 = arith.constant 0 : i32
    %c0_i32_0 = arith.constant 0 : i32
    %c0_i32_1 = arith.constant 0 : i32
    return %c0_i32, %c0_i32_0 : i32, i32
  }
  func.func @transform_4(%arg0: i32) -> (i32, i32) {
    %c0_i32 = arith.constant 0 : i32
    %c0_i32_0 = arith.constant 0 : i32
    %c0_i32_1 = arith.constant 0 : i32
    return %c0_i32, %c0_i32_0 : i32, i32
  }
  func.func @transform_5(%arg0: i32) -> (i32, i32) {
    %c0_i32 = arith.constant 0 : i32
    %c0_i32_0 = arith.constant 0 : i32
    %c0_i32_1 = arith.constant 0 : i32
    return %c0_i32, %c0_i32_0 : i32, i32
  }
  func.func @transform_6(%arg0: i32) -> (i32, i32) {
    %c0_i32 = arith.constant 0 : i32
    %c0_i32_0 = arith.constant 0 : i32
    return %arg0, %c0_i32 : i32, i32
  }
  func.func @transform_7(%arg0: i32) -> (i32, i32) {
    %c0_i32 = arith.constant 0 : i32
    %c0_i32_0 = arith.constant 0 : i32
    return %arg0, %c0_i32 : i32, i32
  }
}

module attributes {stable_mosaic.version = 11 : i64} {
  func.func @pair_moe_kernel(%arg0: i32, %arg1: memref<24x1xi32, #tpu.memory_space<vmem>>, %arg2: memref<24x1xi32, #tpu.memory_space<vmem>>, %arg3: memref<8x128xbf16, #tpu.memory_space<vmem>>, %arg4: memref<128x640xbf16, #tpu.memory_space<vmem>>, %arg5: memref<128x640xbf16, #tpu.memory_space<vmem>>, %arg6: memref<1x640xf32, #tpu.memory_space<vmem>>, %arg7: memref<256x128xbf16, #tpu.memory_space<vmem>>, %arg8: memref<256x128xbf16, #tpu.memory_space<vmem>>, %arg9: memref<2x128xf32, #tpu.memory_space<vmem>>, %arg10: memref<24x128xf32, #tpu.memory_space<vmem>>) attributes {dimension_semantics = [#tpu.dimension_semantics<parallel>], iteration_bounds = array<i64: 1>, scalar_prefetch = 0 : i64, scratch_operands = 0 : i64, tpu.core_type = #tpu.core_type<tc>, window_params = [{transform_indices = @transform_0, window_bounds = array<i64: 24, 1>}, {transform_indices = @transform_1, window_bounds = array<i64: 24, 1>}, {pipeline_mode = #tpu.pipeline_mode<synchronous>, transform_indices = @transform_2, window_bounds = array<i64: 8, 128>}, {pipeline_mode = #tpu.pipeline_mode<synchronous>, transform_indices = @transform_3, window_bounds = array<i64: 128, 640>}, {pipeline_mode = #tpu.pipeline_mode<synchronous>, transform_indices = @transform_4, window_bounds = array<i64: 128, 640>}, {pipeline_mode = #tpu.pipeline_mode<synchronous>, transform_indices = @transform_5, window_bounds = array<i64: 1, 640>}, {pipeline_mode = #tpu.pipeline_mode<synchronous>, transform_indices = @transform_6, window_bounds = array<i64: 256, 128>}, {pipeline_mode = #tpu.pipeline_mode<synchronous>, transform_indices = @transform_7, window_bounds = array<i64: 256, 128>}, {pipeline_mode = #tpu.pipeline_mode<synchronous>, transform_indices = @transform_8, window_bounds = array<i64: 2, 128>}, {transform_indices = @transform_9, window_bounds = array<i64: 24, 128>}]} {
    %0 = tpu.iota {dimensions = array<i32: 1>} : vector<24x8xi32>
    %c0 = arith.constant 0 : index
    %c0_0 = arith.constant 0 : index
    %1 = vector.load %arg1[%c0, %c0_0] : memref<24x1xi32, #tpu.memory_space<vmem>>, vector<24x1xi32>
    %2 = vector.broadcast %1 : vector<24x1xi32> to vector<24x8xi32>
    %3 = arith.cmpi eq, %0, %2 : vector<24x8xi32>
    %cst = arith.constant 1.000000e+00 : f32
    %cst_1 = arith.constant 0.000000e+00 : f32
    %4 = vector.broadcast %cst : f32 to vector<24x8xf32>
    %5 = vector.broadcast %cst_1 : f32 to vector<24x8xf32>
    %6 = arith.select %3, %4, %5 : vector<24x8xi1>, vector<24x8xf32>
    %7 = arith.truncf %6 : vector<24x8xf32> to vector<24x8xbf16>
    %c0_2 = arith.constant 0 : index
    %c0_3 = arith.constant 0 : index
    %8 = vector.load %arg2[%c0_2, %c0_3] : memref<24x1xi32, #tpu.memory_space<vmem>>, vector<24x1xi32>
    %9 = vector.broadcast %8 : vector<24x1xi32> to vector<24x8xi32>
    %10 = arith.cmpi eq, %0, %9 : vector<24x8xi32>
    %cst_4 = arith.constant 1.000000e+00 : f32
    %cst_5 = arith.constant 0.000000e+00 : f32
    %11 = vector.broadcast %cst_4 : f32 to vector<24x8xf32>
    %12 = vector.broadcast %cst_5 : f32 to vector<24x8xf32>
    %13 = arith.select %10, %11, %12 : vector<24x8xi1>, vector<24x8xf32>
    %14 = arith.truncf %13 : vector<24x8xf32> to vector<24x8xbf16>
    %c0_6 = arith.constant 0 : index
    %c0_7 = arith.constant 0 : index
    %15 = vector.load %arg3[%c0_6, %c0_7] : memref<8x128xbf16, #tpu.memory_space<vmem>>, vector<8x128xbf16>
    %cst_8 = arith.constant dense<0.000000e+00> : vector<24x128xf32>
    %16 = tpu.matmul %7, %15, %cst_8 {dimension_numbers = #tpu.dot_dimension_numbers<[1], [0], [0], [1], [0, 0, 1, 1], [], []>} : vector<24x8xbf16>, vector<8x128xbf16>, vector<24x128xf32> -> vector<24x128xf32>
    %17 = arith.truncf %16 : vector<24x128xf32> to vector<24x128xbf16>
    %cst_9 = arith.constant dense<0.000000e+00> : vector<24x128xf32>
    %18 = tpu.matmul %14, %15, %cst_9 {dimension_numbers = #tpu.dot_dimension_numbers<[1], [0], [0], [1], [0, 0, 1, 1], [], []>} : vector<24x8xbf16>, vector<8x128xbf16>, vector<24x128xf32> -> vector<24x128xf32>
    %19 = arith.truncf %18 : vector<24x128xf32> to vector<24x128xbf16>
    %c0_10 = arith.constant 0 : index
    %c0_11 = arith.constant 0 : index
    %20 = vector.load %arg4[%c0_10, %c0_11] : memref<128x640xbf16, #tpu.memory_space<vmem>>, vector<128x640xbf16>
    %cst_12 = arith.constant dense<0.000000e+00> : vector<24x640xf32>
    %21 = tpu.matmul %17, %20, %cst_12 {dimension_numbers = #tpu.dot_dimension_numbers<[1], [0], [0], [1], [0, 0, 1, 1], [], []>} : vector<24x128xbf16>, vector<128x640xbf16>, vector<24x640xf32> -> vector<24x640xf32>
    %c0_13 = arith.constant 0 : index
    %c0_14 = arith.constant 0 : index
    %22 = vector.load %arg5[%c0_13, %c0_14] : memref<128x640xbf16, #tpu.memory_space<vmem>>, vector<128x640xbf16>
    %cst_15 = arith.constant dense<0.000000e+00> : vector<24x640xf32>
    %23 = tpu.matmul %19, %22, %cst_15 {dimension_numbers = #tpu.dot_dimension_numbers<[1], [0], [0], [1], [0, 0, 1, 1], [], []>} : vector<24x128xbf16>, vector<128x640xbf16>, vector<24x640xf32> -> vector<24x640xf32>
    %24 = arith.addf %21, %23 : vector<24x640xf32>
    %c0_16 = arith.constant 0 : index
    %c0_17 = arith.constant 0 : index
    %25 = vector.load %arg6[%c0_16, %c0_17] : memref<1x640xf32, #tpu.memory_space<vmem>>, vector<1x640xf32>
    %26 = vector.broadcast %25 : vector<1x640xf32> to vector<24x640xf32>
    %27 = arith.addf %24, %26 : vector<24x640xf32>
    %28 = vector.extract_strided_slice %27 {offsets = [0, 512], sizes = [24, 1], strides = [1, 1]} : vector<24x640xf32> to vector<24x1xf32>
    %29 = vector.extract_strided_slice %27 {offsets = [0, 513], sizes = [24, 1], strides = [1, 1]} : vector<24x640xf32> to vector<24x1xf32>
    %30 = vector.extract_strided_slice %27 {offsets = [0, 0], sizes = [24, 256], strides = [1, 1]} : vector<24x640xf32> to vector<24x256xf32>
    %31 = vector.broadcast %28 : vector<24x1xf32> to vector<24x256xf32>
    %32 = arith.mulf %31, %30 : vector<24x256xf32>
    %33 = arith.truncf %32 : vector<24x256xf32> to vector<24x256xbf16>
    %34 = vector.extract_strided_slice %27 {offsets = [0, 256], sizes = [24, 256], strides = [1, 1]} : vector<24x640xf32> to vector<24x256xf32>
    %35 = vector.broadcast %29 : vector<24x1xf32> to vector<24x256xf32>
    %36 = arith.mulf %35, %34 : vector<24x256xf32>
    %37 = arith.truncf %36 : vector<24x256xf32> to vector<24x256xbf16>
    %c0_18 = arith.constant 0 : index
    %c0_19 = arith.constant 0 : index
    %38 = vector.load %arg9[%c0_18, %c0_19] : memref<2x128xf32, #tpu.memory_space<vmem>>, vector<2x128xf32>
    %c0_20 = arith.constant 0 : index
    %c0_21 = arith.constant 0 : index
    %39 = vector.load %arg7[%c0_20, %c0_21] : memref<256x128xbf16, #tpu.memory_space<vmem>>, vector<256x128xbf16>
    %cst_22 = arith.constant dense<0.000000e+00> : vector<24x128xf32>
    %40 = tpu.matmul %33, %39, %cst_22 {dimension_numbers = #tpu.dot_dimension_numbers<[1], [0], [0], [1], [0, 0, 1, 1], [], []>} : vector<24x256xbf16>, vector<256x128xbf16>, vector<24x128xf32> -> vector<24x128xf32>
    %c0_23 = arith.constant 0 : index
    %c0_24 = arith.constant 0 : index
    %41 = vector.load %arg8[%c0_23, %c0_24] : memref<256x128xbf16, #tpu.memory_space<vmem>>, vector<256x128xbf16>
    %cst_25 = arith.constant dense<0.000000e+00> : vector<24x128xf32>
    %42 = tpu.matmul %37, %41, %cst_25 {dimension_numbers = #tpu.dot_dimension_numbers<[1], [0], [0], [1], [0, 0, 1, 1], [], []>} : vector<24x256xbf16>, vector<256x128xbf16>, vector<24x128xf32> -> vector<24x128xf32>
    %43 = arith.addf %40, %42 : vector<24x128xf32>
    %44 = vector.extract_strided_slice %38 {offsets = [0, 0], sizes = [1, 128], strides = [1, 1]} : vector<2x128xf32> to vector<1x128xf32>
    %45 = vector.broadcast %28 : vector<24x1xf32> to vector<24x128xf32>
    %46 = vector.broadcast %44 : vector<1x128xf32> to vector<24x128xf32>
    %47 = arith.mulf %45, %46 : vector<24x128xf32>
    %48 = arith.addf %43, %47 : vector<24x128xf32>
    %49 = vector.extract_strided_slice %38 {offsets = [1, 0], sizes = [1, 128], strides = [1, 1]} : vector<2x128xf32> to vector<1x128xf32>
    %50 = vector.broadcast %29 : vector<24x1xf32> to vector<24x128xf32>
    %51 = vector.broadcast %49 : vector<1x128xf32> to vector<24x128xf32>
    %52 = arith.mulf %50, %51 : vector<24x128xf32>
    %53 = arith.addf %48, %52 : vector<24x128xf32>
    %c0_26 = arith.constant 0 : index
    %c0_27 = arith.constant 0 : index
    %54 = vector.load %arg10[%c0_26, %c0_27] : memref<24x128xf32, #tpu.memory_space<vmem>>, vector<24x128xf32>
    tpu.vector_store %arg10[%c0_26, %c0_27], %53 {strides = array<i32>} : memref<24x128xf32, #tpu.memory_space<vmem>>, vector<24x128xf32>,
    return
  }
  func.func @transform_0(%arg0: i32) -> (i32, i32) {
    %c0_i32 = arith.constant 0 : i32
    %c0_i32_0 = arith.constant 0 : i32
    return %arg0, %c0_i32 : i32, i32
  }
  func.func @transform_1(%arg0: i32) -> (i32, i32) {
    %c0_i32 = arith.constant 0 : i32
    %c0_i32_0 = arith.constant 0 : i32
    return %arg0, %c0_i32 : i32, i32
  }
  func.func @transform_2(%arg0: i32) -> (i32, i32) {
    %c0_i32 = arith.constant 0 : i32
    %c0_i32_0 = arith.constant 0 : i32
    %c0_i32_1 = arith.constant 0 : i32
    return %c0_i32, %c0_i32_0 : i32, i32
  }
  func.func @transform_3(%arg0: i32) -> (i32, i32) {
    %c0_i32 = arith.constant 0 : i32
    %c0_i32_0 = arith.constant 0 : i32
    %c0_i32_1 = arith.constant 0 : i32
    return %c0_i32, %c0_i32_0 : i32, i32
  }
  func.func @transform_4(%arg0: i32) -> (i32, i32) {
    %c0_i32 = arith.constant 0 : i32
    %c0_i32_0 = arith.constant 0 : i32
    %c0_i32_1 = arith.constant 0 : i32
    return %c0_i32, %c0_i32_0 : i32, i32
  }
  func.func @transform_5(%arg0: i32) -> (i32, i32) {
    %c0_i32 = arith.constant 0 : i32
    %c0_i32_0 = arith.constant 0 : i32
    %c0_i32_1 = arith.constant 0 : i32
    return %c0_i32, %c0_i32_0 : i32, i32
  }
  func.func @transform_6(%arg0: i32) -> (i32, i32) {
    %c0_i32 = arith.constant 0 : i32
    %c0_i32_0 = arith.constant 0 : i32
    %c0_i32_1 = arith.constant 0 : i32
    return %c0_i32, %c0_i32_0 : i32, i32
  }
  func.func @transform_7(%arg0: i32) -> (i32, i32) {
    %c0_i32 = arith.constant 0 : i32
    %c0_i32_0 = arith.constant 0 : i32
    %c0_i32_1 = arith.constant 0 : i32
    return %c0_i32, %c0_i32_0 : i32, i32
  }
  func.func @transform_8(%arg0: i32) -> (i32, i32) {
    %c0_i32 = arith.constant 0 : i32
    %c0_i32_0 = arith.constant 0 : i32
    %c0_i32_1 = arith.constant 0 : i32
    return %c0_i32, %c0_i32_0 : i32, i32
  }
  func.func @transform_9(%arg0: i32) -> (i32, i32) {
    %c0_i32 = arith.constant 0 : i32
    %c0_i32_0 = arith.constant 0 : i32
    return %arg0, %c0_i32 : i32, i32
  }
}

</mosaic_0001>

<llo_original>
// kernel: guided_moe_forward.2
$region0: #{guided_moe_forward.2}
  #allocation0 [shape = 'u32[]', space=smem, size = 0x4, offset = 0x4, fixed_abs, tag = 'smem constant byte address 0x4 - core index']
  #allocation1 [shape = 'u32[144,128]{1,0:T(1,128)}', space=vmem, size = 0x12000, scoped, tag = 'internal scratch']
  %s0 = inlined_call_operand.vmem [shape: f32[8,32], index: 0, kind: input, shape index: {}]
  %s1 = inlined_call_operand.vmem [shape: f32[8,1], index: 1, kind: input, shape index: {}]
  %s2 = inlined_call_operand.vmem [shape: bf16[32,32], index: 2, kind: input, shape index: {}]
  %s3 = inlined_call_operand.vmem [shape: f32[1,32], index: 3, kind: input, shape index: {}]
  %s4 = inlined_call_operand.vmem [shape: bf16[32,128], index: 4, kind: input, shape index: {}]
  %s5 = inlined_call_operand.vmem [shape: f32[1,128], index: 5, kind: input, shape index: {}]
  %s6 = inlined_call_operand.vmem [shape: f32[8,128], index: 6, kind: output, shape index: {0}]
  %s7 = inlined_call_operand.vmem [shape: bf16[8,128], index: 7, kind: output, shape index: {1}]
  %8 = xla_tuple %s6, %s7
  %s9 = sld [smem:[#allocation0]]
  $region42: #{guided_moe_forward.2} parent=0
    _
  %s11 = ssub.s32 1, %s9
  %s12 = scalar_select 0, %s11, %s9
  // Predicated region
  $region2: #{guided_moe_forward.2} parent=0 // pred_check
    _
  $region3: #{guided_moe_forward.2} parent=0 // pred_check_branch
    %14 = sbr.rel (0) target = $region5
  $region4: #{guided_moe_forward.2} parent=0 // pred_region
    _
  $region5: #{guided_moe_forward.2} parent=0 // pred_fallthru
    _
  // Predicated region
  $region6: #{guided_moe_forward.2} parent=0 // pred_check
    _
  $region7: #{guided_moe_forward.2} parent=0 // pred_check_branch
    %16 = sbr.rel (0) target = $region9
  $region8: #{guided_moe_forward.2} parent=0 // pred_region
    _
  $region9: #{guided_moe_forward.2} parent=0 // pred_fallthru
    _
  // Predicated region
  $region10: #{guided_moe_forward.2} parent=0 // pred_check
    _
  $region11: #{guided_moe_forward.2} parent=0 // pred_check_branch
    %18 = sbr.rel (0) target = $region13
  $region12: #{guided_moe_forward.2} parent=0 // pred_region
    _
  $region13: #{guided_moe_forward.2} parent=0 // pred_fallthru
    _
  // Predicated region
  $region14: #{guided_moe_forward.2} parent=0 // pred_check
    _
  $region15: #{guided_moe_forward.2} parent=0 // pred_check_branch
    %20 = sbr.rel (0) target = $region17
  $region16: #{guided_moe_forward.2} parent=0 // pred_region
    _
  $region17: #{guided_moe_forward.2} parent=0 // pred_fallthru
    _
  // Predicated region
  $region18: #{guided_moe_forward.2} parent=0 // pred_check
    _
  $region19: #{guided_moe_forward.2} parent=0 // pred_check_branch
    %22 = sbr.rel (0) target = $region21
  $region20: #{guided_moe_forward.2} parent=0 // pred_region
    _
  $region21: #{guided_moe_forward.2} parent=0 // pred_fallthru
    _
  // Predicated region
  $region22: #{guided_moe_forward.2} parent=0 // pred_check
    _
  $region23: #{guided_moe_forward.2} parent=0 // pred_check_branch
    %24 = sbr.rel (0) target = $region25
  $region24: #{guided_moe_forward.2} parent=0 // pred_region
    _
  $region25: #{guided_moe_forward.2} parent=0 // pred_fallthru
    _
  %v26 = vld [vmem:[%s0] sm:$0xff]
  %v27 = vpack.c.bf16 %v26, %v26
  %v28 = vld [vmem:[%s2] sm:$0xf]
  %v29 = vld [vmem:[%s2 + $0x4] sm:$0xf]
  %v30 = vld [vmem:[%s2 + $0x8] sm:$0xf]
  %v31 = vld [vmem:[%s2 + $0xc] sm:$0xf]
  %v32 = vld [vmem:[%s3] sm:$0x1]
  %v34 = vlaneseq
  %v35 = vshrl.u32 %v34, 7
  %v36 = vsub.s32 0, %v35
  %v37 = vrot.slane %v32, %v36
  %v43 = vunpack.c.l.b16 %v28
  %v44 = vunpack.c.l.b16 %v29
  %v45 = vunpack.c.l.b16 %v30
  %v46 = vunpack.c.l.b16 %v31
  %v47 = vpack.c.b16 %v44, %v43
  %v48 = vpack.c.b16 %v46, %v45
  %vm51 = vcmask 261120
  %v53 = vsel %vm51, %v27, 0
  %55 = vmatprep.subr.bf16.mxu0 0
  %56 = vmatpush1.bf16.msra.mxu0 0
  %57 = vmatprep.subr.bf16.mxu0 0
  %58 = vmatpush1.bf16.msra.mxu0 0
  %59 = vmatprep.subr.bf16.mxu0 0
  %60 = vmatpush1.bf16.msra.mxu0 0
  %61 = vmatprep.subr.bf16.mxu0 0
  %62 = vmatpush1.bf16.msra.mxu0 0
  %63 = vmatprep.subr.bf16.mxu0 0
  %64 = vmatpush1.bf16.msra.mxu0 0
  %65 = vmatprep.subr.bf16.mxu0 0
  %66 = vmatpush1.bf16.msra.mxu0 0
  %67 = vmatprep.subr.bf16.mxu0 0
  %68 = vmatpush1.bf16.msra.mxu0 %v48
  %69 = vmatprep.subr.bf16.mxu0 0
  %70 = vmatpush1.bf16.msra.mxu0 %v47
  %71 = vmatprep.subr.bf16.mxu0 0
  %72 = vmatpush2.bf16.msra.mxu0 0
  %73 = vmatprep.subr.bf16.mxu0 0
  %74 = vmatpush2.bf16.msra.mxu0 0
  %75 = vmatprep.subr.bf16.mxu0 0
  %76 = vmatpush2.bf16.msra.mxu0 0
  %77 = vmatprep.subr.bf16.mxu0 0
  %78 = vmatpush2.bf16.msra.mxu0 0
  %79 = vmatprep.subr.bf16.mxu0 0
  %80 = vmatpush2.bf16.msra.mxu0 0
  %81 = vmatprep.subr.bf16.mxu0 0
  %82 = vmatpush2.bf16.msra.mxu0 0
  %83 = vmatprep.subr.bf16.mxu0 0
  %84 = vmatpush2.bf16.msra.mxu0 0
  %85 = vmatprep.subr.bf16.mxu0 0
  %86 = vmatpush2.bf16.msra.mxu0 0
  %87 = vmatprep.mubr.bf16.mxu0 0
  %88 = vmatmul.mubr.bf16.gmra.mxu0 %v53
  %v89 = vpop.f32.mrf.mxu0
  %v90 = vadd.f32 %v37, %v89
  %v91 = vpop.f32.mrf.mxu0
  %v92 = vpop.f32.mrf.mxu0
  %v93 = vpop.f32.mrf.mxu0
  %94 = vdwg.mxu0
  %v95 = vtanh.pop %v90
  %v96 = vpack.c.bf16 %v95, %v95
  %v97 = vld [vmem:[%s4] sm:$0xf]
  %v98 = vld [vmem:[%s4 + $0x4] sm:$0xf]
  %v99 = vld [vmem:[%s4 + $0x8] sm:$0xf]
  %v100 = vld [vmem:[%s4 + $0xc] sm:$0xf]
  %v101 = vld [vmem:[%s5] sm:$0x1]
  %v103 = vlaneseq
  %v104 = vshrl.u32 %v103, 7
  %v105 = vsub.s32 0, %v104
  %v106 = vrot.slane %v101, %v105
  %v112 = vunpack.c.l.b16 %v97
  %v113 = vunpack.c.l.b16 %v98
  %v114 = vunpack.c.l.b16 %v99
  %v115 = vunpack.c.l.b16 %v100
  %v116 = vpack.c.b16 %v113, %v112
  %v117 = vpack.c.b16 %v115, %v114
  %v121 = vsel %vm51, %v96, 0
  %123 = vmatprep.subr.bf16.mxu0 0
  %124 = vmatpush1.bf16.msra.mxu0 0
  %125 = vmatprep.subr.bf16.mxu0 0
  %126 = vmatpush1.bf16.msra.mxu0 0
  %127 = vmatprep.subr.bf16.mxu0 0
  %128 = vmatpush1.bf16.msra.mxu0 0
  %129 = vmatprep.subr.bf16.mxu0 0
  %130 = vmatpush1.bf16.msra.mxu0 0
  %131 = vmatprep.subr.bf16.mxu0 0
  %132 = vmatpush1.bf16.msra.mxu0 0
  %133 = vmatprep.subr.bf16.mxu0 0
  %134 = vmatpush1.bf16.msra.mxu0 0
  %135 = vmatprep.subr.bf16.mxu0 0
  %136 = vmatpush1.bf16.msra.mxu0 %v117
  %137 = vmatprep.subr.bf16.mxu0 0
  %138 = vmatpush1.bf16.msra.mxu0 %v116
  %139 = vmatprep.subr.bf16.mxu0 0
  %140 = vmatpush2.bf16.msra.mxu0 0
  %141 = vmatprep.subr.bf16.mxu0 0
  %142 = vmatpush2.bf16.msra.mxu0 0
  %143 = vmatprep.subr.bf16.mxu0 0
  %144 = vmatpush2.bf16.msra.mxu0 0
  %145 = vmatprep.subr.bf16.mxu0 0
  %146 = vmatpush2.bf16.msra.mxu0 0
  %147 = vmatprep.subr.bf16.mxu0 0
  %148 = vmatpush2.bf16.msra.mxu0 0
  %149 = vmatprep.subr.bf16.mxu0 0
  %150 = vmatpush2.bf16.msra.mxu0 0
  %151 = vmatprep.subr.bf16.mxu0 0
  %152 = vmatpush2.bf16.msra.mxu0 0
  %153 = vmatprep.subr.bf16.mxu0 0
  %154 = vmatpush2.bf16.msra.mxu0 0
  %155 = vmatprep.mubr.bf16.mxu0 0
  %156 = vmatmul.mubr.bf16.gmra.mxu0 %v121
  %v157 = vpop.f32.mrf.mxu0
  %v158 = vadd.f32 %v106, %v157
  %v159 = vpop.f32.mrf.mxu0
  %v160 = vpop.f32.mrf.mxu0
  %v161 = vpop.f32.mrf.mxu0
  %162 = vdwg.mxu0
  %v163 = vlaneseq
  %v164 = vand.u32 %v163, 127
  %vm165 = vcmp.eq.s32.totalorder %v164, 39
  %v166 = vld [vmem:[%s1] sm:$0xff]
  %168 = vset.pattern.permute.xlu0 0
  %169 = vperm.xlu0 %168, %v166
  %v170 = vpop.permute.xlu0 %169
  %v172 = vsel %vm165, %v170, %v158
  %173 = vst [vmem:[%s6] sm:$0xff] %v172
  %v174 = vpack.c.bf16 %v172, %v172
  %175 = vst [vmem:[%s7] sm:$0xf] %v174
  // Predicated region
  $region26: #{guided_moe_forward.2} parent=0 // pred_check
    _
  $region27: #{guided_moe_forward.2} parent=0 // pred_check_branch
    %177 = sbr.rel (0) target = $region29
  $region28: #{guided_moe_forward.2} parent=0 // pred_region
    _
  $region29: #{guided_moe_forward.2} parent=0 // pred_fallthru
    _
  // Predicated region
  $region30: #{guided_moe_forward.2} parent=0 // pred_check
    _
  $region31: #{guided_moe_forward.2} parent=0 // pred_check_branch
    %179 = sbr.rel (0) target = $region33
  $region32: #{guided_moe_forward.2} parent=0 // pred_region
    _
  $region33: #{guided_moe_forward.2} parent=0 // pred_fallthru
    _
  // Predicated region
  $region34: #{guided_moe_forward.2} parent=0 // pred_check
    _
  $region35: #{guided_moe_forward.2} parent=0 // pred_check_branch
    %181 = sbr.rel (0) target = $region37
  $region36: #{guided_moe_forward.2} parent=0 // pred_region
    _
  $region37: #{guided_moe_forward.2} parent=0 // pred_fallthru
    _
  // Predicated region
  $region38: #{guided_moe_forward.2} parent=0 // pred_check
    _
  $region39: #{guided_moe_forward.2} parent=0 // pred_check_branch
    %183 = sbr.rel (0) target = $region41
  $region40: #{guided_moe_forward.2} parent=0 // pred_region
    _
  $region41: #{guided_moe_forward.2} parent=0 // pred_fallthru
    _

// kernel: guided_moe_forward.3
$region0: #{guided_moe_forward.3}
  #allocation0 [shape = 'u32[]', space=smem, size = 0x4, offset = 0x4, fixed_abs, tag = 'smem constant byte address 0x4 - core index']
  #allocation1 [shape = 'u32[144,128]{1,0:T(1,128)}', space=vmem, size = 0x12000, scoped, tag = 'internal scratch']
  %s0 = inlined_call_operand.vmem [shape: s32[24,1], index: 0, kind: input, shape index: {}]
  %s1 = inlined_call_operand.vmem [shape: s32[24,1], index: 1, kind: input, shape index: {}]
  %s2 = inlined_call_operand.vmem [shape: bf16[8,128], index: 2, kind: input, shape index: {}]
  %s3 = inlined_call_operand.vmem [shape: bf16[128,640], index: 3, kind: input, shape index: {}]
  %s4 = inlined_call_operand.vmem [shape: bf16[128,640], index: 4, kind: input, shape index: {}]
  %s5 = inlined_call_operand.vmem [shape: f32[1,640], index: 5, kind: input, shape index: {}]
  %s6 = inlined_call_operand.vmem [shape: bf16[256,128], index: 6, kind: input, shape index: {}]
  %s7 = inlined_call_operand.vmem [shape: bf16[256,128], index: 7, kind: input, shape index: {}]
  %s8 = inlined_call_operand.vmem [shape: f32[2,128], index: 8, kind: input, shape index: {}]
  %s9 = inlined_call_operand.vmem [shape: f32[24,128], index: 9, kind: output, shape index: {}]
  %s10 = sld [smem:[#allocation0]]
  $region46: #{guided_moe_forward.3} parent=0
    _
  %s12 = ssub.s32 1, %s10
  %s13 = scalar_select 0, %s12, %s10
  // Predicated region
  $region2: #{guided_moe_forward.3} parent=0 // pred_check
    _
  $region3: #{guided_moe_forward.3} parent=0 // pred_check_branch
    %15 = sbr.rel (0) target = $region5
  $region4: #{guided_moe_forward.3} parent=0 // pred_region
    _
  $region5: #{guided_moe_forward.3} parent=0 // pred_fallthru
    _
  // Predicated region
  $region6: #{guided_moe_forward.3} parent=0 // pred_check
    _
  $region7: #{guided_moe_forward.3} parent=0 // pred_check_branch
    %17 = sbr.rel (0) target = $region9
  $region8: #{guided_moe_forward.3} parent=0 // pred_region
    _
  $region9: #{guided_moe_forward.3} parent=0 // pred_fallthru
    _
  // Predicated region
  $region10: #{guided_moe_forward.3} parent=0 // pred_check
    _
  $region11: #{guided_moe_forward.3} parent=0 // pred_check_branch
    %19 = sbr.rel (0) target = $region13
  $region12: #{guided_moe_forward.3} parent=0 // pred_region
    _
  $region13: #{guided_moe_forward.3} parent=0 // pred_fallthru
    _
  // Predicated region
  $region14: #{guided_moe_forward.3} parent=0 // pred_check
    _
  $region15: #{guided_moe_forward.3} parent=0 // pred_check_branch
    %21 = sbr.rel (0) target = $region17
  $region16: #{guided_moe_forward.3} parent=0 // pred_region
    _
  $region17: #{guided_moe_forward.3} parent=0 // pred_fallthru
    _
  // Predicated region
  $region18: #{guided_moe_forward.3} parent=0 // pred_check
    _
  $region19: #{guided_moe_forward.3} parent=0 // pred_check_branch
    %23 = sbr.rel (0) target = $region21
  $region20: #{guided_moe_forward.3} parent=0 // pred_region
    _
  $region21: #{guided_moe_forward.3} parent=0 // pred_fallthru
    _
  // Predicated region
  $region22: #{guided_moe_forward.3} parent=0 // pred_check
    _
  $region23: #{guided_moe_forward.3} parent=0 // pred_check_branch
    %25 = sbr.rel (0) target = $region25
  $region24: #{guided_moe_forward.3} parent=0 // pred_region
    _
  $region25: #{guided_moe_forward.3} parent=0 // pred_fallthru
    _
  // Predicated region
  $region26: #{guided_moe_forward.3} parent=0 // pred_check
    _
  $region27: #{guided_moe_forward.3} parent=0 // pred_check_branch
    %27 = sbr.rel (0) target = $region29
  $region28: #{guided_moe_forward.3} parent=0 // pred_region
    _
  $region29: #{guided_moe_forward.3} parent=0 // pred_fallthru
    _
  // Predicated region
  $region30: #{guided_moe_forward.3} parent=0 // pred_check
    _
  $region31: #{guided_moe_forward.3} parent=0 // pred_check_branch
    %29 = sbr.rel (0) target = $region33
  $region32: #{guided_moe_forward.3} parent=0 // pred_region
    _
  $region33: #{guided_moe_forward.3} parent=0 // pred_fallthru
    _
  // Predicated region
  $region34: #{guided_moe_forward.3} parent=0 // pred_check
    _
  $region35: #{guided_moe_forward.3} parent=0 // pred_check_branch
    %31 = sbr.rel (0) target = $region37
  $region36: #{guided_moe_forward.3} parent=0 // pred_region
    _
  $region37: #{guided_moe_forward.3} parent=0 // pred_fallthru
    _
  %v33 = vlaneseq
  %v34 = vand.u32 %v33, 127
  %v35 = vld [vmem:[%s0] sm:$0xff]
  %v36 = vld [vmem:[%s0 + $0x8] sm:$0xff]
  %v37 = vld [vmem:[%s0 + $0x10] sm:$0xff]
  %38 = vset.pattern.permute.xlu0 0
  %39 = vperm.xlu0 %38, %v35
  %v40 = vpop.permute.xlu0 %39
  %41 = vset.pattern.permute.xlu0 0
  %42 = vperm.xlu0 %41, %v36
  %v43 = vpop.permute.xlu0 %42
  %44 = vset.pattern.permute.xlu0 0
  %45 = vperm.xlu0 %44, %v37
  %v46 = vpop.permute.xlu0 %45
  %vm47 = vcmp.eq.s32.totalorder %v34, %v40
  %vm48 = vcmp.eq.s32.totalorder %v34, %v43
  %vm49 = vcmp.eq.s32.totalorder %v34, %v46
  %v50 = vsel %vm47, 1.0, 0.0
  %v51 = vsel %vm48, 1.0, 0.0
  %v52 = vsel %vm49, 1.0, 0.0
  %v53 = vpack.c.bf16 %v51, %v50
  %v54 = vpack.c.bf16 %v52, %v52
  %v55 = vld [vmem:[%s1] sm:$0xff]
  %v56 = vld [vmem:[%s1 + $0x8] sm:$0xff]
  %v57 = vld [vmem:[%s1 + $0x10] sm:$0xff]
  %58 = vset.pattern.permute.xlu0 0
  %59 = vperm.xlu0 %58, %v55
  %v60 = vpop.permute.xlu0 %59
  %61 = vset.pattern.permute.xlu0 0
  %62 = vperm.xlu0 %61, %v56
  %v63 = vpop.permute.xlu0 %62
  %64 = vset.pattern.permute.xlu0 0
  %65 = vperm.xlu0 %64, %v57
  %v66 = vpop.permute.xlu0 %65
  %vm67 = vcmp.eq.s32.totalorder %v34, %v60
  %vm68 = vcmp.eq.s32.totalorder %v34, %v63
  %vm69 = vcmp.eq.s32.totalorder %v34, %v66
  %v70 = vsel %vm67, 1.0, 0.0
  %v71 = vsel %vm68, 1.0, 0.0
  %v72 = vsel %vm69, 1.0, 0.0
  %v73 = vpack.c.bf16 %v71, %v70
  %v74 = vpack.c.bf16 %v72, %v72
  %v75 = vld [vmem:[%s2] sm:$0xf]
  %vm76 = vcmask 64512
  %v78 = vsel %vm76, %v53, 0
  %v81 = vsel %vm76, %v54, 0
  %vm83 = vcmask 1043456
  %v85 = vsel %vm83, %v75, 0
  %87 = vmatprep.subr.bf16.mxu0 0
  %88 = vmatpush1.bf16.msra.mxu0 0
  %89 = vmatprep.subr.bf16.mxu0 0
  %90 = vmatpush1.bf16.msra.mxu0 0
  %91 = vmatprep.subr.bf16.mxu0 0
  %92 = vmatpush1.bf16.msra.mxu0 0
  %93 = vmatprep.subr.bf16.mxu0 0
  %94 = vmatpush1.bf16.msra.mxu0 0
  %95 = vmatprep.subr.bf16.mxu0 0
  %96 = vmatpush1.bf16.msra.mxu0 0
  %97 = vmatprep.subr.bf16.mxu0 0
  %98 = vmatpush1.bf16.msra.mxu0 0
  %99 = vmatprep.subr.bf16.mxu0 0
  %100 = vmatpush1.bf16.msra.mxu0 0
  %101 = vmatprep.subr.bf16.mxu0 0
  %102 = vmatpush1.bf16.msra.mxu0 %v85
  %103 = vmatprep.subr.bf16.mxu0 0
  %104 = vmatpush2.bf16.msra.mxu0 0
  %105 = vmatprep.subr.bf16.mxu0 0
  %106 = vmatpush2.bf16.msra.mxu0 0
  %107 = vmatprep.subr.bf16.mxu0 0
  %108 = vmatpush2.bf16.msra.mxu0 0
  %109 = vmatprep.subr.bf16.mxu0 0
  %110 = vmatpush2.bf16.msra.mxu0 0
  %111 = vmatprep.subr.bf16.mxu0 0
  %112 = vmatpush2.bf16.msra.mxu0 0
  %113 = vmatprep.subr.bf16.mxu0 0
  %114 = vmatpush2.bf16.msra.mxu0 0
  %115 = vmatprep.subr.bf16.mxu0 0
  %116 = vmatpush2.bf16.msra.mxu0 0
  %117 = vmatprep.subr.bf16.mxu0 0
  %118 = vmatpush2.bf16.msra.mxu0 0
  %119 = vmatprep.mubr.bf16.mxu0 0
  %120 = vmatmul.mubr.bf16.gmra.mxu0 %v78
  %v121 = vpop.f32.mrf.mxu0
  %v122 = vadd.f32 0.0, %v121
  %v123 = vpop.f32.mrf.mxu0
  %v124 = vpop.f32.mrf.mxu0
  %v125 = vadd.f32 0.0, %v124
  %v126 = vpop.f32.mrf.mxu0
  %127 = vmatprep.mubr.bf16.mxu0 0
  %128 = vmatmul.mubr.bf16.gmra.mxu0 %v81
  %v129 = vpop.f32.mrf.mxu0
  %v130 = vadd.f32 0.0, %v129
  %v131 = vpop.f32.mrf.mxu0
  %v132 = vpop.f32.mrf.mxu0
  %v133 = vpop.f32.mrf.mxu0
  %134 = vdwg.mxu0
  %v135 = vpack.c.bf16 %v125, %v122
  %v136 = vpack.c.bf16 %v130, %v130
  %v138 = vsel %vm76, %v73, 0
  %v141 = vsel %vm76, %v74, 0
  %143 = vmatprep.subr.bf16.mxu0 0
  %144 = vmatpush1.bf16.msra.mxu0 0
  %145 = vmatprep.subr.bf16.mxu0 0
  %146 = vmatpush1.bf16.msra.mxu0 0
  %147 = vmatprep.subr.bf16.mxu0 0
  %148 = vmatpush1.bf16.msra.mxu0 0
  %149 = vmatprep.subr.bf16.mxu0 0
  %150 = vmatpush1.bf16.msra.mxu0 0
  %151 = vmatprep.subr.bf16.mxu0 0
  %152 = vmatpush1.bf16.msra.mxu0 0
  %153 = vmatprep.subr.bf16.mxu0 0
  %154 = vmatpush1.bf16.msra.mxu0 0
  %155 = vmatprep.subr.bf16.mxu0 0
  %156 = vmatpush1.bf16.msra.mxu0 0
  %157 = vmatprep.subr.bf16.mxu0 0
  %158 = vmatpush1.bf16.msra.mxu0 %v85
  %159 = vmatprep.subr.bf16.mxu0 0
  %160 = vmatpush2.bf16.msra.mxu0 0
  %161 = vmatprep.subr.bf16.mxu0 0
  %162 = vmatpush2.bf16.msra.mxu0 0
  %163 = vmatprep.subr.bf16.mxu0 0
  %164 = vmatpush2.bf16.msra.mxu0 0
  %165 = vmatprep.subr.bf16.mxu0 0
  %166 = vmatpush2.bf16.msra.mxu0 0
  %167 = vmatprep.subr.bf16.mxu0 0
  %168 = vmatpush2.bf16.msra.mxu0 0
  %169 = vmatprep.subr.bf16.mxu0 0
  %170 = vmatpush2.bf16.msra.mxu0 0
  %171 = vmatprep.subr.bf16.mxu0 0
  %172 = vmatpush2.bf16.msra.mxu0 0
  %173 = vmatprep.subr.bf16.mxu0 0
  %174 = vmatpush2.bf16.msra.mxu0 0
  %175 = vmatprep.mubr.bf16.mxu0 0
  %176 = vmatmul.mubr.bf16.gmra.mxu0 %v138
  %v177 = vpop.f32.mrf.mxu0
  %v178 = vadd.f32 0.0, %v177
  %v179 = vpop.f32.mrf.mxu0
  %v180 = vpop.f32.mrf.mxu0
  %v181 = vadd.f32 0.0, %v180
  %v182 = vpop.f32.mrf.mxu0
  %183 = vmatprep.mubr.bf16.mxu0 0
  %184 = vmatmul.mubr.bf16.gmra.mxu0 %v141
  %v185 = vpop.f32.mrf.mxu0
  %v186 = vadd.f32 0.0, %v185
  %v187 = vpop.f32.mrf.mxu0
  %v188 = vpop.f32.mrf.mxu0
  %v189 = vpop.f32.mrf.mxu0
  %190 = vdwg.mxu0
  %v191 = vpack.c.bf16 %v181, %v178
  %v192 = vpack.c.bf16 %v186, %v186
  %v193 = vld [vmem:[%s3] sm:$0xff]
  %v194 = vld [vmem:[%s3 + $0x8] sm:$0xff]
  %v195 = vld [vmem:[%s3 + $0x10] sm:$0xf]
  %v196 = vld [vmem:[%s3 + $0x14] sm:$0xff]
  %v197 = vld [vmem:[%s3 + $0x1c] sm:$0xff]
  %v198 = vld [vmem:[%s3 + $0x24] sm:$0xf]
  %v199 = vld [vmem:[%s3 + $0x28] sm:$0xff]
  %v200 = vld [vmem:[%s3 + $0x30] sm:$0xff]
  %v201 = vld [vmem:[%s3 + $0x38] sm:$0xf]
  %v202 = vld [vmem:[%s3 + $0x3c] sm:$0xff]
  %v203 = vld [vmem:[%s3 + $0x44] sm:$0xff]
  %v204 = vld [vmem:[%s3 + $0x4c] sm:$0xf]
  %v205 = vld [vmem:[%s3 + $0x50] sm:$0xff]
  %v206 = vld [vmem:[%s3 + $0x58] sm:$0xff]
  %v207 = vld [vmem:[%s3 + $0x60] sm:$0xf]
  %v208 = vld [vmem:[%s3 + $0x64] sm:$0xff]
  %v209 = vld [vmem:[%s3 + $0x6c] sm:$0xff]
  %v210 = vld [vmem:[%s3 + $0x74] sm:$0xf]
  %v211 = vld [vmem:[%s3 + $0x78] sm:$0xff]
  %v212 = vld [vmem:[%s3 + $0x80] sm:$0xff]
  %v213 = vld [vmem:[%s3 + $0x88] sm:$0xf]
  %v214 = vld [vmem:[%s3 + $0x8c] sm:$0xff]
  %v215 = vld [vmem:[%s3 + $0x94] sm:$0xff]
  %v216 = vld [vmem:[%s3 + $0x9c] sm:$0xf]
  %v217 = vld [vmem:[%s3 + $0xa0] sm:$0xff]
  %v218 = vld [vmem:[%s3 + $0xa8] sm:$0xff]
  %v219 = vld [vmem:[%s3 + $0xb0] sm:$0xf]
  %v220 = vld [vmem:[%s3 + $0xb4] sm:$0xff]
  %v221 = vld [vmem:[%s3 + $0xbc] sm:$0xff]
  %v222 = vld [vmem:[%s3 + $0xc4] sm:$0xf]
  %v223 = vld [vmem:[%s3 + $0xc8] sm:$0xff]
  %v224 = vld [vmem:[%s3 + $0xd0] sm:$0xff]
  %v225 = vld [vmem:[%s3 + $0xd8] sm:$0xf]
  %v226 = vld [vmem:[%s3 + $0xdc] sm:$0xff]
  %v227 = vld [vmem:[%s3 + $0xe4] sm:$0xff]
  %v228 = vld [vmem:[%s3 + $0xec] sm:$0xf]
  %v229 = vld [vmem:[%s3 + $0xf0] sm:$0xff]
  %v230 = vld [vmem:[%s3 + $0xf8] sm:$0xff]
  %v231 = vld [vmem:[%s3 + $0x100] sm:$0xf]
  %v232 = vld [vmem:[%s3 + $0x104] sm:$0xff]
  %v233 = vld [vmem:[%s3 + $0x10c] sm:$0xff]
  %v234 = vld [vmem:[%s3 + $0x114] sm:$0xf]
  %v235 = vld [vmem:[%s3 + $0x118] sm:$0xff]
  %v236 = vld [vmem:[%s3 + $0x120] sm:$0xff]
  %v237 = vld [vmem:[%s3 + $0x128] sm:$0xf]
  %v238 = vld [vmem:[%s3 + $0x12c] sm:$0xff]
  %v239 = vld [vmem:[%s3 + $0x134] sm:$0xff]
  %v240 = vld [vmem:[%s3 + $0x13c] sm:$0xf]
  %v241 = vld [vmem:[%s4] sm:$0xff]
  %v242 = vld [vmem:[%s4 + $0x8] sm:$0xff]
  %v243 = vld [vmem:[%s4 + $0x10] sm:$0xf]
  %v244 = vld [vmem:[%s4 + $0x14] sm:$0xff]
  %v245 = vld [vmem:[%s4 + $0x1c] sm:$0xff]
  %v246 = vld [vmem:[%s4 + $0x24] sm:$0xf]
  %v247 = vld [vmem:[%s4 + $0x28] sm:$0xff]
  %v248 = vld [vmem:[%s4 + $0x30] sm:$0xff]
  %v249 = vld [vmem:[%s4 + $0x38] sm:$0xf]
  %v250 = vld [vmem:[%s4 + $0x3c] sm:$0xff]
  %v251 = vld [vmem:[%s4 + $0x44] sm:$0xff]
  %v252 = vld [vmem:[%s4 + $0x4c] sm:$0xf]
  %v253 = vld [vmem:[%s4 + $0x50] sm:$0xff]
  %v254 = vld [vmem:[%s4 + $0x58] sm:$0xff]
  %v255 = vld [vmem:[%s4 + $0x60] sm:$0xf]
  %v256 = vld [vmem:[%s4 + $0x64] sm:$0xff]
  %v257 = vld [vmem:[%s4 + $0x6c] sm:$0xff]
  %v258 = vld [vmem:[%s4 + $0x74] sm:$0xf]
  %v259 = vld [vmem:[%s4 + $0x78] sm:$0xff]
  %v260 = vld [vmem:[%s4 + $0x80] sm:$0xff]
  %v261 = vld [vmem:[%s4 + $0x88] sm:$0xf]
  %v262 = vld [vmem:[%s4 + $0x8c] sm:$0xff]
  %v263 = vld [vmem:[%s4 + $0x94] sm:$0xff]
  %v264 = vld [vmem:[%s4 + $0x9c] sm:$0xf]
  %v265 = vld [vmem:[%s4 + $0xa0] sm:$0xff]
  %v266 = vld [vmem:[%s4 + $0xa8] sm:$0xff]
  %v267 = vld [vmem:[%s4 + $0xb0] sm:$0xf]
  %v268 = vld [vmem:[%s4 + $0xb4] sm:$0xff]
  %v269 = vld [vmem:[%s4 + $0xbc] sm:$0xff]
  %v270 = vld [vmem:[%s4 + $0xc4] sm:$0xf]
  %v271 = vld [vmem:[%s4 + $0xc8] sm:$0xff]
  %v272 = vld [vmem:[%s4 + $0xd0] sm:$0xff]
  %v273 = vld [vmem:[%s4 + $0xd8] sm:$0xf]
  %v274 = vld [vmem:[%s4 + $0xdc] sm:$0xff]
  %v275 = vld [vmem:[%s4 + $0xe4] sm:$0xff]
  %v276 = vld [vmem:[%s4 + $0xec] sm:$0xf]
  %v277 = vld [vmem:[%s4 + $0xf0] sm:$0xff]
  %v278 = vld [vmem:[%s4 + $0xf8] sm:$0xff]
  %v279 = vld [vmem:[%s4 + $0x100] sm:$0xf]
  %v280 = vld [vmem:[%s4 + $0x104] sm:$0xff]
  %v281 = vld [vmem:[%s4 + $0x10c] sm:$0xff]
  %v282 = vld [vmem:[%s4 + $0x114] sm:$0xf]
  %v283 = vld [vmem:[%s4 + $0x118] sm:$0xff]
  %v284 = vld [vmem:[%s4 + $0x120] sm:$0xff]
  %v285 = vld [vmem:[%s4 + $0x128] sm:$0xf]
  %v286 = vld [vmem:[%s4 + $0x12c] sm:$0xff]
  %v287 = vld [vmem:[%s4 + $0x134] sm:$0xff]
  %v288 = vld [vmem:[%s4 + $0x13c] sm:$0xf]
  %v337 = vunpack.c.l.b16 %v241
  %v338 = vunpack.c.h.b16 %v241
  %v339 = vunpack.c.l.b16 %v242
  %v340 = vunpack.c.h.b16 %v242
  %v341 = vunpack.c.l.b16 %v243
  %v342 = vunpack.c.l.b16 %v244
  %v343 = vunpack.c.h.b16 %v244
  %v344 = vunpack.c.l.b16 %v245
  %v345 = vunpack.c.h.b16 %v245
  %v346 = vunpack.c.l.b16 %v246
  %v347 = vunpack.c.l.b16 %v247
  %v348 = vunpack.c.h.b16 %v247
  %v349 = vunpack.c.l.b16 %v248
  %v350 = vunpack.c.h.b16 %v248
  %v351 = vunpack.c.l.b16 %v249
  %v352 = vunpack.c.l.b16 %v250
  %v353 = vunpack.c.h.b16 %v250
  %v354 = vunpack.c.l.b16 %v251
  %v355 = vunpack.c.h.b16 %v251
  %v356 = vunpack.c.l.b16 %v252
  %v357 = vunpack.c.l.b16 %v253
  %v358 = vunpack.c.h.b16 %v253
  %v359 = vunpack.c.l.b16 %v254
  %v360 = vunpack.c.h.b16 %v254
  %v361 = vunpack.c.l.b16 %v255
  %v362 = vunpack.c.l.b16 %v256
  %v363 = vunpack.c.h.b16 %v256
  %v364 = vunpack.c.l.b16 %v257
  %v365 = vunpack.c.h.b16 %v257
  %v366 = vunpack.c.l.b16 %v258
  %v367 = vunpack.c.l.b16 %v259
  %v368 = vunpack.c.h.b16 %v259
  %v369 = vunpack.c.l.b16 %v260
  %v370 = vunpack.c.h.b16 %v260
  %v371 = vunpack.c.l.b16 %v261
  %v372 = vunpack.c.l.b16 %v262
  %v373 = vunpack.c.h.b16 %v262
  %v374 = vunpack.c.l.b16 %v263
  %v375 = vunpack.c.h.b16 %v263
  %v376 = vunpack.c.l.b16 %v264
  %v377 = vunpack.c.l.b16 %v265
  %v378 = vunpack.c.h.b16 %v265
  %v379 = vunpack.c.l.b16 %v266
  %v380 = vunpack.c.h.b16 %v266
  %v381 = vunpack.c.l.b16 %v267
  %v382 = vunpack.c.l.b16 %v268
  %v383 = vunpack.c.h.b16 %v268
  %v384 = vunpack.c.l.b16 %v269
  %v385 = vunpack.c.h.b16 %v269
  %v386 = vunpack.c.l.b16 %v270
  %v387 = vunpack.c.l.b16 %v271
  %v388 = vunpack.c.h.b16 %v271
  %v389 = vunpack.c.l.b16 %v272
  %v390 = vunpack.c.h.b16 %v272
  %v391 = vunpack.c.l.b16 %v273
  %v392 = vunpack.c.l.b16 %v274
  %v393 = vunpack.c.h.b16 %v274
  %v394 = vunpack.c.l.b16 %v275
  %v395 = vunpack.c.h.b16 %v275
  %v396 = vunpack.c.l.b16 %v276
  %v397 = vunpack.c.l.b16 %v277
  %v398 = vunpack.c.h.b16 %v277
  %v399 = vunpack.c.l.b16 %v278
  %v400 = vunpack.c.h.b16 %v278
  %v401 = vunpack.c.l.b16 %v279
  %v402 = vunpack.c.l.b16 %v280
  %v403 = vunpack.c.h.b16 %v280
  %v404 = vunpack.c.l.b16 %v281
  %v405 = vunpack.c.h.b16 %v281
  %v406 = vunpack.c.l.b16 %v282
  %v407 = vunpack.c.l.b16 %v283
  %v408 = vunpack.c.h.b16 %v283
  %v409 = vunpack.c.l.b16 %v284
  %v410 = vunpack.c.h.b16 %v284
  %v411 = vunpack.c.l.b16 %v285
  %v412 = vunpack.c.l.b16 %v286
  %v413 = vunpack.c.h.b16 %v286
  %v414 = vunpack.c.l.b16 %v287
  %v415 = vunpack.c.h.b16 %v287
  %v416 = vunpack.c.l.b16 %v288
  %v417 = vpack.c.b16 %v342, %v337
  %v418 = vpack.c.b16 %v343, %v338
  %v419 = vpack.c.b16 %v344, %v339
  %v420 = vpack.c.b16 %v345, %v340
  %v421 = vpack.c.b16 %v346, %v341
  %v422 = vpack.c.b16 %v352, %v347
  %v423 = vpack.c.b16 %v353, %v348
  %v424 = vpack.c.b16 %v354, %v349
  %v425 = vpack.c.b16 %v355, %v350
  %v426 = vpack.c.b16 %v356, %v351
  %v427 = vpack.c.b16 %v362, %v357
  %v428 = vpack.c.b16 %v363, %v358
  %v429 = vpack.c.b16 %v364, %v359
  %v430 = vpack.c.b16 %v365, %v360
  %v431 = vpack.c.b16 %v366, %v361
  %v432 = vpack.c.b16 %v372, %v367
  %v433 = vpack.c.b16 %v373, %v368
  %v434 = vpack.c.b16 %v374, %v369
  %v435 = vpack.c.b16 %v375, %v370
  %v436 = vpack.c.b16 %v376, %v371
  %v437 = vpack.c.b16 %v382, %v377
  %v438 = vpack.c.b16 %v383, %v378
  %v439 = vpack.c.b16 %v384, %v379
  %v440 = vpack.c.b16 %v385, %v380
  %v441 = vpack.c.b16 %v386, %v381
  %v442 = vpack.c.b16 %v392, %v387
  %v443 = vpack.c.b16 %v393, %v388
  %v444 = vpack.c.b16 %v394, %v389
  %v445 = vpack.c.b16 %v395, %v390
  %v446 = vpack.c.b16 %v396, %v391
  %v447 = vpack.c.b16 %v402, %v397
  %v448 = vpack.c.b16 %v403, %v398
  %v449 = vpack.c.b16 %v404, %v399
  %v450 = vpack.c.b16 %v405, %v400
  %v451 = vpack.c.b16 %v406, %v401
  %v452 = vpack.c.b16 %v412, %v407
  %v453 = vpack.c.b16 %v413, %v408
  %v454 = vpack.c.b16 %v414, %v409
  %v455 = vpack.c.b16 %v415, %v410
  %v456 = vpack.c.b16 %v416, %v411
  %497 = vmatprep.subr.bf16.mxu0 %v453
  %498 = vmatpush1.bf16.msra.mxu0 %v452
  %499 = vmatprep.subr.bf16.mxu0 %v448
  %500 = vmatpush1.bf16.msra.mxu0 %v447
  %501 = vmatprep.subr.bf16.mxu0 %v443
  %502 = vmatpush1.bf16.msra.mxu0 %v442
  %503 = vmatprep.subr.bf16.mxu0 %v438
  %504 = vmatpush1.bf16.msra.mxu0 %v437
  %505 = vmatprep.subr.bf16.mxu0 %v433
  %506 = vmatpush1.bf16.msra.mxu0 %v432
  %507 = vmatprep.subr.bf16.mxu0 %v428
  %508 = vmatpush1.bf16.msra.mxu0 %v427
  %509 = vmatprep.subr.bf16.mxu0 %v423
  %510 = vmatpush1.bf16.msra.mxu0 %v422
  %511 = vmatprep.subr.bf16.mxu0 %v418
  %512 = vmatpush1.bf16.msra.mxu0 %v417
  %513 = vmatprep.subr.bf16.mxu0 0
  %514 = vmatpush2.bf16.msra.mxu0 0
  %515 = vmatprep.subr.bf16.mxu0 0
  %516 = vmatpush2.bf16.msra.mxu0 0
  %517 = vmatprep.subr.bf16.mxu0 0
  %518 = vmatpush2.bf16.msra.mxu0 0
  %519 = vmatprep.subr.bf16.mxu0 0
  %520 = vmatpush2.bf16.msra.mxu0 0
  %521 = vmatprep.subr.bf16.mxu0 0
  %522 = vmatpush2.bf16.msra.mxu0 0
  %523 = vmatprep.subr.bf16.mxu0 0
  %524 = vmatpush2.bf16.msra.mxu0 0
  %525 = vmatprep.subr.bf16.mxu0 0
  %526 = vmatpush2.bf16.msra.mxu0 0
  %527 = vmatprep.subr.bf16.mxu0 0
  %528 = vmatpush2.bf16.msra.mxu0 0
  %529 = vmatprep.mubr.bf16.mxu0 0
  %530 = vmatmul.mubr.bf16.gmra.mxu0 %v191
  %v531 = vpop.f32.mrf.mxu0
  %v532 = vadd.f32 0.0, %v531
  %v533 = vpop.f32.mrf.mxu0
  %v534 = vadd.f32 0.0, %v533
  %v535 = vpop.f32.mrf.mxu0
  %v536 = vadd.f32 0.0, %v535
  %v537 = vpop.f32.mrf.mxu0
  %v538 = vadd.f32 0.0, %v537
  %539 = vmatprep.mubr.bf16.mxu0 0
  %540 = vmatmul.mubr.bf16.gmra.mxu0 %v192
  %v541 = vpop.f32.mrf.mxu0
  %v542 = vadd.f32 0.0, %v541
  %v543 = vpop.f32.mrf.mxu0
  %v544 = vadd.f32 0.0, %v543
  %v545 = vpop.f32.mrf.mxu0
  %v546 = vpop.f32.mrf.mxu0
  %547 = vdwg.mxu0
  %548 = vmatprep.subr.bf16.mxu0 %v455
  %549 = vmatpush1.bf16.msra.mxu0 %v454
  %550 = vmatprep.subr.bf16.mxu0 %v450
  %551 = vmatpush1.bf16.msra.mxu0 %v449
  %552 = vmatprep.subr.bf16.mxu0 %v445
  %553 = vmatpush1.bf16.msra.mxu0 %v444
  %554 = vmatprep.subr.bf16.mxu0 %v440
  %555 = vmatpush1.bf16.msra.mxu0 %v439
  %556 = vmatprep.subr.bf16.mxu0 %v435
  %557 = vmatpush1.bf16.msra.mxu0 %v434
  %558 = vmatprep.subr.bf16.mxu0 %v430
  %559 = vmatpush1.bf16.msra.mxu0 %v429
  %560 = vmatprep.subr.bf16.mxu0 %v425
  %561 = vmatpush1.bf16.msra.mxu0 %v424
  %562 = vmatprep.subr.bf16.mxu0 %v420
  %563 = vmatpush1.bf16.msra.mxu0 %v419
  %564 = vmatprep.subr.bf16.mxu0 0
  %565 = vmatpush2.bf16.msra.mxu0 0
  %566 = vmatprep.subr.bf16.mxu0 0
  %567 = vmatpush2.bf16.msra.mxu0 0
  %568 = vmatprep.subr.bf16.mxu0 0
  %569 = vmatpush2.bf16.msra.mxu0 0
  %570 = vmatprep.subr.bf16.mxu0 0
  %571 = vmatpush2.bf16.msra.mxu0 0
  %572 = vmatprep.subr.bf16.mxu0 0
  %573 = vmatpush2.bf16.msra.mxu0 0
  %574 = vmatprep.subr.bf16.mxu0 0
  %575 = vmatpush2.bf16.msra.mxu0 0
  %576 = vmatprep.subr.bf16.mxu0 0
  %577 = vmatpush2.bf16.msra.mxu0 0
  %578 = vmatprep.subr.bf16.mxu0 0
  %579 = vmatpush2.bf16.msra.mxu0 0
  %580 = vmatprep.mubr.bf16.mxu0 0
  %581 = vmatmul.mubr.bf16.gmra.mxu0 %v191
  %v582 = vpop.f32.mrf.mxu0
  %v583 = vadd.f32 0.0, %v582
  %v584 = vpop.f32.mrf.mxu0
  %v585 = vadd.f32 0.0, %v584
  %v586 = vpop.f32.mrf.mxu0
  %v587 = vadd.f32 0.0, %v586
  %v588 = vpop.f32.mrf.mxu0
  %v589 = vadd.f32 0.0, %v588
  %590 = vmatprep.mubr.bf16.mxu0 0
  %591 = vmatmul.mubr.bf16.gmra.mxu0 %v192
  %v592 = vpop.f32.mrf.mxu0
  %v593 = vadd.f32 0.0, %v592
  %v594 = vpop.f32.mrf.mxu0
  %v595 = vadd.f32 0.0, %v594
  %v596 = vpop.f32.mrf.mxu0
  %v597 = vpop.f32.mrf.mxu0
  %598 = vdwg.mxu0
  %599 = vmatprep.subr.bf16.mxu0 0
  %600 = vmatpush1.bf16.msra.mxu0 %v456
  %601 = vmatprep.subr.bf16.mxu0 0
  %602 = vmatpush1.bf16.msra.mxu0 %v451
  %603 = vmatprep.subr.bf16.mxu0 0
  %604 = vmatpush1.bf16.msra.mxu0 %v446
  %605 = vmatprep.subr.bf16.mxu0 0
  %606 = vmatpush1.bf16.msra.mxu0 %v441
  %607 = vmatprep.subr.bf16.mxu0 0
  %608 = vmatpush1.bf16.msra.mxu0 %v436
  %609 = vmatprep.subr.bf16.mxu0 0
  %610 = vmatpush1.bf16.msra.mxu0 %v431
  %611 = vmatprep.subr.bf16.mxu0 0
  %612 = vmatpush1.bf16.msra.mxu0 %v426
  %613 = vmatprep.subr.bf16.mxu0 0
  %614 = vmatpush1.bf16.msra.mxu0 %v421
  %615 = vmatprep.subr.bf16.mxu0 0
  %616 = vmatpush2.bf16.msra.mxu0 0
  %617 = vmatprep.subr.bf16.mxu0 0
  %618 = vmatpush2.bf16.msra.mxu0 0
  %619 = vmatprep.subr.bf16.mxu0 0
  %620 = vmatpush2.bf16.msra.mxu0 0
  %621 = vmatprep.subr.bf16.mxu0 0
  %622 = vmatpush2.bf16.msra.mxu0 0
  %623 = vmatprep.subr.bf16.mxu0 0
  %624 = vmatpush2.bf16.msra.mxu0 0
  %625 = vmatprep.subr.bf16.mxu0 0
  %626 = vmatpush2.bf16.msra.mxu0 0
  %627 = vmatprep.subr.bf16.mxu0 0
  %628 = vmatpush2.bf16.msra.mxu0 0
  %629 = vmatprep.subr.bf16.mxu0 0
  %630 = vmatpush2.bf16.msra.mxu0 0
  %631 = vmatprep.mubr.bf16.mxu0 0
  %632 = vmatmul.mubr.bf16.gmra.mxu0 %v191
  %v633 = vpop.f32.mrf.mxu0
  %v634 = vadd.f32 0.0, %v633
  %v635 = vpop.f32.mrf.mxu0
  %v636 = vpop.f32.mrf.mxu0
  %v637 = vadd.f32 0.0, %v636
  %v638 = vpop.f32.mrf.mxu0
  %639 = vmatprep.mubr.bf16.mxu0 0
  %640 = vmatmul.mubr.bf16.gmra.mxu0 %v192
  %v641 = vpop.f32.mrf.mxu0
  %v642 = vadd.f32 0.0, %v641
  %v643 = vpop.f32.mrf.mxu0
  %v644 = vpop.f32.mrf.mxu0
  %v645 = vpop.f32.mrf.mxu0
  %646 = vdwg.mxu0
  %v695 = vunpack.c.l.b16 %v193
  %v696 = vunpack.c.h.b16 %v193
  %v697 = vunpack.c.l.b16 %v194
  %v698 = vunpack.c.h.b16 %v194
  %v699 = vunpack.c.l.b16 %v195
  %v700 = vunpack.c.l.b16 %v196
  %v701 = vunpack.c.h.b16 %v196
  %v702 = vunpack.c.l.b16 %v197
  %v703 = vunpack.c.h.b16 %v197
  %v704 = vunpack.c.l.b16 %v198
  %v705 = vunpack.c.l.b16 %v199
  %v706 = vunpack.c.h.b16 %v199
  %v707 = vunpack.c.l.b16 %v200
  %v708 = vunpack.c.h.b16 %v200
  %v709 = vunpack.c.l.b16 %v201
  %v710 = vunpack.c.l.b16 %v202
  %v711 = vunpack.c.h.b16 %v202
  %v712 = vunpack.c.l.b16 %v203
  %v713 = vunpack.c.h.b16 %v203
  %v714 = vunpack.c.l.b16 %v204
  %v715 = vunpack.c.l.b16 %v205
  %v716 = vunpack.c.h.b16 %v205
  %v717 = vunpack.c.l.b16 %v206
  %v718 = vunpack.c.h.b16 %v206
  %v719 = vunpack.c.l.b16 %v207
  %v720 = vunpack.c.l.b16 %v208
  %v721 = vunpack.c.h.b16 %v208
  %v722 = vunpack.c.l.b16 %v209
  %v723 = vunpack.c.h.b16 %v209
  %v724 = vunpack.c.l.b16 %v210
  %v725 = vunpack.c.l.b16 %v211
  %v726 = vunpack.c.h.b16 %v211
  %v727 = vunpack.c.l.b16 %v212
  %v728 = vunpack.c.h.b16 %v212
  %v729 = vunpack.c.l.b16 %v213
  %v730 = vunpack.c.l.b16 %v214
  %v731 = vunpack.c.h.b16 %v214
  %v732 = vunpack.c.l.b16 %v215
  %v733 = vunpack.c.h.b16 %v215
  %v734 = vunpack.c.l.b16 %v216
  %v735 = vunpack.c.l.b16 %v217
  %v736 = vunpack.c.h.b16 %v217
  %v737 = vunpack.c.l.b16 %v218
  %v738 = vunpack.c.h.b16 %v218
  %v739 = vunpack.c.l.b16 %v219
  %v740 = vunpack.c.l.b16 %v220
  %v741 = vunpack.c.h.b16 %v220
  %v742 = vunpack.c.l.b16 %v221
  %v743 = vunpack.c.h.b16 %v221
  %v744 = vunpack.c.l.b16 %v222
  %v745 = vunpack.c.l.b16 %v223
  %v746 = vunpack.c.h.b16 %v223
  %v747 = vunpack.c.l.b16 %v224
  %v748 = vunpack.c.h.b16 %v224
  %v749 = vunpack.c.l.b16 %v225
  %v750 = vunpack.c.l.b16 %v226
  %v751 = vunpack.c.h.b16 %v226
  %v752 = vunpack.c.l.b16 %v227
  %v753 = vunpack.c.h.b16 %v227
  %v754 = vunpack.c.l.b16 %v228
  %v755 = vunpack.c.l.b16 %v229
  %v756 = vunpack.c.h.b16 %v229
  %v757 = vunpack.c.l.b16 %v230
  %v758 = vunpack.c.h.b16 %v230
  %v759 = vunpack.c.l.b16 %v231
  %v760 = vunpack.c.l.b16 %v232
  %v761 = vunpack.c.h.b16 %v232
  %v762 = vunpack.c.l.b16 %v233
  %v763 = vunpack.c.h.b16 %v233
  %v764 = vunpack.c.l.b16 %v234
  %v765 = vunpack.c.l.b16 %v235
  %v766 = vunpack.c.h.b16 %v235
  %v767 = vunpack.c.l.b16 %v236
  %v768 = vunpack.c.h.b16 %v236
  %v769 = vunpack.c.l.b16 %v237
  %v770 = vunpack.c.l.b16 %v238
  %v771 = vunpack.c.h.b16 %v238
  %v772 = vunpack.c.l.b16 %v239
  %v773 = vunpack.c.h.b16 %v239
  %v774 = vunpack.c.l.b16 %v240
  %v775 = vpack.c.b16 %v700, %v695
  %v776 = vpack.c.b16 %v701, %v696
  %v777 = vpack.c.b16 %v702, %v697
  %v778 = vpack.c.b16 %v703, %v698
  %v779 = vpack.c.b16 %v704, %v699
  %v780 = vpack.c.b16 %v710, %v705
  %v781 = vpack.c.b16 %v711, %v706
  %v782 = vpack.c.b16 %v712, %v707
  %v783 = vpack.c.b16 %v713, %v708
  %v784 = vpack.c.b16 %v714, %v709
  %v785 = vpack.c.b16 %v720, %v715
  %v786 = vpack.c.b16 %v721, %v716
  %v787 = vpack.c.b16 %v722, %v717
  %v788 = vpack.c.b16 %v723, %v718
  %v789 = vpack.c.b16 %v724, %v719
  %v790 = vpack.c.b16 %v730, %v725
  %v791 = vpack.c.b16 %v731, %v726
  %v792 = vpack.c.b16 %v732, %v727
  %v793 = vpack.c.b16 %v733, %v728
  %v794 = vpack.c.b16 %v734, %v729
  %v795 = vpack.c.b16 %v740, %v735
  %v796 = vpack.c.b16 %v741, %v736
  %v797 = vpack.c.b16 %v742, %v737
  %v798 = vpack.c.b16 %v743, %v738
  %v799 = vpack.c.b16 %v744, %v739
  %v800 = vpack.c.b16 %v750, %v745
  %v801 = vpack.c.b16 %v751, %v746
  %v802 = vpack.c.b16 %v752, %v747
  %v803 = vpack.c.b16 %v753, %v748
  %v804 = vpack.c.b16 %v754, %v749
  %v805 = vpack.c.b16 %v760, %v755
  %v806 = vpack.c.b16 %v761, %v756
  %v807 = vpack.c.b16 %v762, %v757
  %v808 = vpack.c.b16 %v763, %v758
  %v809 = vpack.c.b16 %v764, %v759
  %v810 = vpack.c.b16 %v770, %v765
  %v811 = vpack.c.b16 %v771, %v766
  %v812 = vpack.c.b16 %v772, %v767
  %v813 = vpack.c.b16 %v773, %v768
  %v814 = vpack.c.b16 %v774, %v769
  %855 = vmatprep.subr.bf16.mxu0 %v811
  %856 = vmatpush1.bf16.msra.mxu0 %v810
  %857 = vmatprep.subr.bf16.mxu0 %v806
  %858 = vmatpush1.bf16.msra.mxu0 %v805
  %859 = vmatprep.subr.bf16.mxu0 %v801
  %860 = vmatpush1.bf16.msra.mxu0 %v800
  %861 = vmatprep.subr.bf16.mxu0 %v796
  %862 = vmatpush1.bf16.msra.mxu0 %v795
  %863 = vmatprep.subr.bf16.mxu0 %v791
  %864 = vmatpush1.bf16.msra.mxu0 %v790
  %865 = vmatprep.subr.bf16.mxu0 %v786
  %866 = vmatpush1.bf16.msra.mxu0 %v785
  %867 = vmatprep.subr.bf16.mxu0 %v781
  %868 = vmatpush1.bf16.msra.mxu0 %v780
  %869 = vmatprep.subr.bf16.mxu0 %v776
  %870 = vmatpush1.bf16.msra.mxu0 %v775
  %871 = vmatprep.subr.bf16.mxu0 0
  %872 = vmatpush2.bf16.msra.mxu0 0
  %873 = vmatprep.subr.bf16.mxu0 0
  %874 = vmatpush2.bf16.msra.mxu0 0
  %875 = vmatprep.subr.bf16.mxu0 0
  %876 = vmatpush2.bf16.msra.mxu0 0
  %877 = vmatprep.subr.bf16.mxu0 0
  %878 = vmatpush2.bf16.msra.mxu0 0
  %879 = vmatprep.subr.bf16.mxu0 0
  %880 = vmatpush2.bf16.msra.mxu0 0
  %881 = vmatprep.subr.bf16.mxu0 0
  %882 = vmatpush2.bf16.msra.mxu0 0
  %883 = vmatprep.subr.bf16.mxu0 0
  %884 = vmatpush2.bf16.msra.mxu0 0
  %885 = vmatprep.subr.bf16.mxu0 0
  %886 = vmatpush2.bf16.msra.mxu0 0
  %887 = vmatprep.mubr.bf16.mxu0 0
  %888 = vmatmul.mubr.bf16.gmra.mxu0 %v135
  %v889 = vpop.f32.mrf.mxu0
  %v890 = vadd.f32 %v532, %v889
  %v891 = vpop.f32.mrf.mxu0
  %v892 = vadd.f32 %v534, %v891
  %v893 = vpop.f32.mrf.mxu0
  %v894 = vadd.f32 %v536, %v893
  %v895 = vpop.f32.mrf.mxu0
  %v896 = vadd.f32 %v538, %v895
  %897 = vmatprep.mubr.bf16.mxu0 0
  %898 = vmatmul.mubr.bf16.gmra.mxu0 %v136
  %v899 = vpop.f32.mrf.mxu0
  %v900 = vadd.f32 %v542, %v899
  %v901 = vpop.f32.mrf.mxu0
  %v902 = vadd.f32 %v544, %v901
  %v903 = vpop.f32.mrf.mxu0
  %v904 = vpop.f32.mrf.mxu0
  %905 = vdwg.mxu0
  %906 = vmatprep.subr.bf16.mxu0 %v813
  %907 = vmatpush1.bf16.msra.mxu0 %v812
  %908 = vmatprep.subr.bf16.mxu0 %v808
  %909 = vmatpush1.bf16.msra.mxu0 %v807
  %910 = vmatprep.subr.bf16.mxu0 %v803
  %911 = vmatpush1.bf16.msra.mxu0 %v802
  %912 = vmatprep.subr.bf16.mxu0 %v798
  %913 = vmatpush1.bf16.msra.mxu0 %v797
  %914 = vmatprep.subr.bf16.mxu0 %v793
  %915 = vmatpush1.bf16.msra.mxu0 %v792
  %916 = vmatprep.subr.bf16.mxu0 %v788
  %917 = vmatpush1.bf16.msra.mxu0 %v787
  %918 = vmatprep.subr.bf16.mxu0 %v783
  %919 = vmatpush1.bf16.msra.mxu0 %v782
  %920 = vmatprep.subr.bf16.mxu0 %v778
  %921 = vmatpush1.bf16.msra.mxu0 %v777
  %922 = vmatprep.subr.bf16.mxu0 0
  %923 = vmatpush2.bf16.msra.mxu0 0
  %924 = vmatprep.subr.bf16.mxu0 0
  %925 = vmatpush2.bf16.msra.mxu0 0
  %926 = vmatprep.subr.bf16.mxu0 0
  %927 = vmatpush2.bf16.msra.mxu0 0
  %928 = vmatprep.subr.bf16.mxu0 0
  %929 = vmatpush2.bf16.msra.mxu0 0
  %930 = vmatprep.subr.bf16.mxu0 0
  %931 = vmatpush2.bf16.msra.mxu0 0
  %932 = vmatprep.subr.bf16.mxu0 0
  %933 = vmatpush2.bf16.msra.mxu0 0
  %934 = vmatprep.subr.bf16.mxu0 0
  %935 = vmatpush2.bf16.msra.mxu0 0
  %936 = vmatprep.subr.bf16.mxu0 0
  %937 = vmatpush2.bf16.msra.mxu0 0
  %938 = vmatprep.mubr.bf16.mxu0 0
  %939 = vmatmul.mubr.bf16.gmra.mxu0 %v135
  %v940 = vpop.f32.mrf.mxu0
  %v941 = vadd.f32 %v583, %v940
  %v942 = vpop.f32.mrf.mxu0
  %v943 = vadd.f32 %v585, %v942
  %v944 = vpop.f32.mrf.mxu0
  %v945 = vadd.f32 %v587, %v944
  %v946 = vpop.f32.mrf.mxu0
  %v947 = vadd.f32 %v589, %v946
  %948 = vmatprep.mubr.bf16.mxu0 0
  %949 = vmatmul.mubr.bf16.gmra.mxu0 %v136
  %v950 = vpop.f32.mrf.mxu0
  %v951 = vadd.f32 %v593, %v950
  %v952 = vpop.f32.mrf.mxu0
  %v953 = vadd.f32 %v595, %v952
  %v954 = vpop.f32.mrf.mxu0
  %v955 = vpop.f32.mrf.mxu0
  %956 = vdwg.mxu0
  %957 = vmatprep.subr.bf16.mxu0 0
  %958 = vmatpush1.bf16.msra.mxu0 %v814
  %959 = vmatprep.subr.bf16.mxu0 0
  %960 = vmatpush1.bf16.msra.mxu0 %v809
  %961 = vmatprep.subr.bf16.mxu0 0
  %962 = vmatpush1.bf16.msra.mxu0 %v804
  %963 = vmatprep.subr.bf16.mxu0 0
  %964 = vmatpush1.bf16.msra.mxu0 %v799
  %965 = vmatprep.subr.bf16.mxu0 0
  %966 = vmatpush1.bf16.msra.mxu0 %v794
  %967 = vmatprep.subr.bf16.mxu0 0
  %968 = vmatpush1.bf16.msra.mxu0 %v789
  %969 = vmatprep.subr.bf16.mxu0 0
  %970 = vmatpush1.bf16.msra.mxu0 %v784
  %971 = vmatprep.subr.bf16.mxu0 0
  %972 = vmatpush1.bf16.msra.mxu0 %v779
  %973 = vmatprep.subr.bf16.mxu0 0
  %974 = vmatpush2.bf16.msra.mxu0 0
  %975 = vmatprep.subr.bf16.mxu0 0
  %976 = vmatpush2.bf16.msra.mxu0 0
  %977 = vmatprep.subr.bf16.mxu0 0
  %978 = vmatpush2.bf16.msra.mxu0 0
  %979 = vmatprep.subr.bf16.mxu0 0
  %980 = vmatpush2.bf16.msra.mxu0 0
  %981 = vmatprep.subr.bf16.mxu0 0
  %982 = vmatpush2.bf16.msra.mxu0 0
  %983 = vmatprep.subr.bf16.mxu0 0
  %984 = vmatpush2.bf16.msra.mxu0 0
  %985 = vmatprep.subr.bf16.mxu0 0
  %986 = vmatpush2.bf16.msra.mxu0 0
  %987 = vmatprep.subr.bf16.mxu0 0
  %988 = vmatpush2.bf16.msra.mxu0 0
  %989 = vmatprep.mubr.bf16.mxu0 0
  %990 = vmatmul.mubr.bf16.gmra.mxu0 %v135
  %v991 = vpop.f32.mrf.mxu0
  %v992 = vadd.f32 %v634, %v991
  %v993 = vpop.f32.mrf.mxu0
  %v994 = vpop.f32.mrf.mxu0
  %v995 = vadd.f32 %v637, %v994
  %v996 = vpop.f32.mrf.mxu0
  %997 = vmatprep.mubr.bf16.mxu0 0
  %998 = vmatmul.mubr.bf16.gmra.mxu0 %v136
  %v999 = vpop.f32.mrf.mxu0
  %v1000 = vadd.f32 %v642, %v999
  %v1001 = vpop.f32.mrf.mxu0
  %v1002 = vpop.f32.mrf.mxu0
  %v1003 = vpop.f32.mrf.mxu0
  %1004 = vdwg.mxu0
  %v1005 = vld [vmem:[%s5] sm:$0x1f]
  %v1007 = vlaneseq
  %v1008 = vshrl.u32 %v1007, 7
  %v1009 = vsub.s32 0, %v1008
  %v1010 = vrot.slane %v1005, %v1009
  %v1011 = vlaneseq
  %v1012 = vshrl.u32 %v1011, 7
  %v1013 = vsub.s32 1, %v1012
  %v1014 = vrot.slane %v1005, %v1013
  %v1015 = vlaneseq
  %v1016 = vshrl.u32 %v1015, 7
  %v1017 = vsub.s32 2, %v1016
  %v1018 = vrot.slane %v1005, %v1017
  %v1019 = vlaneseq
  %v1020 = vshrl.u32 %v1019, 7
  %v1021 = vsub.s32 3, %v1020
  %v1022 = vrot.slane %v1005, %v1021
  %v1023 = vlaneseq
  %v1024 = vshrl.u32 %v1023, 7
  %v1025 = vsub.s32 4, %v1024
  %v1026 = vrot.slane %v1005, %v1025
  %v1032 = vadd.f32 %v890, %v1010
  %v1033 = vadd.f32 %v892, %v1014
  %v1034 = vadd.f32 %v941, %v1018
  %v1035 = vadd.f32 %v943, %v1022
  %v1036 = vadd.f32 %v992, %v1026
  %v1037 = vadd.f32 %v894, %v1010
  %v1038 = vadd.f32 %v896, %v1014
  %v1039 = vadd.f32 %v945, %v1018
  %v1040 = vadd.f32 %v947, %v1022
  %v1041 = vadd.f32 %v995, %v1026
  %v1042 = vadd.f32 %v900, %v1010
  %v1043 = vadd.f32 %v902, %v1014
  %v1044 = vadd.f32 %v951, %v1018
  %v1045 = vadd.f32 %v953, %v1022
  %v1046 = vadd.f32 %v1000, %v1026
  %1048 = vset.pattern.permute.xlu0 0
  %1049 = vperm.xlu0 %1048, %v1036
  %v1050 = vpop.permute.xlu0 %1049
  %1053 = vset.pattern.permute.xlu0 0
  %1054 = vperm.xlu0 %1053, %v1041
  %v1055 = vpop.permute.xlu0 %1054
  %1058 = vset.pattern.permute.xlu0 0
  %1059 = vperm.xlu0 %1058, %v1046
  %v1060 = vpop.permute.xlu0 %1059
  %v1062 = vmul.f32 %v1050, %v1032
  %v1063 = vmul.f32 %v1050, %v1033
  %v1064 = vmul.f32 %v1055, %v1037
  %v1065 = vmul.f32 %v1055, %v1038
  %v1066 = vmul.f32 %v1060, %v1042
  %v1067 = vmul.f32 %v1060, %v1043
  %v1068 = vpack.c.bf16 %v1064, %v1062
  %v1069 = vpack.c.bf16 %v1065, %v1063
  %v1070 = vpack.c.bf16 %v1066, %v1066
  %v1071 = vpack.c.bf16 %v1067, %v1067
  %1072 = vset.pattern.permute.xlu0 1
  %1073 = vperm.xlu0 %1072, %v1036
  %v1074 = vpop.permute.xlu0 %1073
  %1076 = vset.pattern.permute.xlu0 1
  %1077 = vperm.xlu0 %1076, %v1041
  %v1078 = vpop.permute.xlu0 %1077
  %1080 = vset.pattern.permute.xlu0 1
  %1081 = vperm.xlu0 %1080, %v1046
  %v1082 = vpop.permute.xlu0 %1081
  %v1084 = vmul.f32 %v1074, %v1034
  %v1085 = vmul.f32 %v1074, %v1035
  %v1086 = vmul.f32 %v1078, %v1039
  %v1087 = vmul.f32 %v1078, %v1040
  %v1088 = vmul.f32 %v1082, %v1044
  %v1089 = vmul.f32 %v1082, %v1045
  %v1090 = vpack.c.bf16 %v1086, %v1084
  %v1091 = vpack.c.bf16 %v1087, %v1085
  %v1092 = vpack.c.bf16 %v1088, %v1088
  %v1093 = vpack.c.bf16 %v1089, %v1089
  %v1094 = vld [vmem:[%s8] sm:$0x3]
  %v1095 = vld [vmem:[%s6] sm:$0xf]
  %v1096 = vld [vmem:[%s6 + $0x4] sm:$0xf]
  %v1097 = vld [vmem:[%s6 + $0x8] sm:$0xf]
  %v1098 = vld [vmem:[%s6 + $0xc] sm:$0xf]
  %v1099 = vld [vmem:[%s6 + $0x10] sm:$0xf]
  %v1100 = vld [vmem:[%s6 + $0x14] sm:$0xf]
  %v1101 = vld [vmem:[%s6 + $0x18] sm:$0xf]
  %v1102 = vld [vmem:[%s6 + $0x1c] sm:$0xf]
  %v1103 = vld [vmem:[%s6 + $0x20] sm:$0xf]
  %v1104 = vld [vmem:[%s6 + $0x24] sm:$0xf]
  %v1105 = vld [vmem:[%s6 + $0x28] sm:$0xf]
  %v1106 = vld [vmem:[%s6 + $0x2c] sm:$0xf]
  %v1107 = vld [vmem:[%s6 + $0x30] sm:$0xf]
  %v1108 = vld [vmem:[%s6 + $0x34] sm:$0xf]
  %v1109 = vld [vmem:[%s6 + $0x38] sm:$0xf]
  %v1110 = vld [vmem:[%s6 + $0x3c] sm:$0xf]
  %v1111 = vld [vmem:[%s6 + $0x40] sm:$0xf]
  %v1112 = vld [vmem:[%s6 + $0x44] sm:$0xf]
  %v1113 = vld [vmem:[%s6 + $0x48] sm:$0xf]
  %v1114 = vld [vmem:[%s6 + $0x4c] sm:$0xf]
  %v1115 = vld [vmem:[%s6 + $0x50] sm:$0xf]
  %v1116 = vld [vmem:[%s6 + $0x54] sm:$0xf]
  %v1117 = vld [vmem:[%s6 + $0x58] sm:$0xf]
  %v1118 = vld [vmem:[%s6 + $0x5c] sm:$0xf]
  %v1119 = vld [vmem:[%s6 + $0x60] sm:$0xf]
  %v1120 = vld [vmem:[%s6 + $0x64] sm:$0xf]
  %v1121 = vld [vmem:[%s6 + $0x68] sm:$0xf]
  %v1122 = vld [vmem:[%s6 + $0x6c] sm:$0xf]
  %v1123 = vld [vmem:[%s6 + $0x70] sm:$0xf]
  %v1124 = vld [vmem:[%s6 + $0x74] sm:$0xf]
  %v1125 = vld [vmem:[%s6 + $0x78] sm:$0xf]
  %v1126 = vld [vmem:[%s6 + $0x7c] sm:$0xf]
  %v1127 = vld [vmem:[%s7] sm:$0xf]
  %v1128 = vld [vmem:[%s7 + $0x4] sm:$0xf]
  %v1129 = vld [vmem:[%s7 + $0x8] sm:$0xf]
  %v1130 = vld [vmem:[%s7 + $0xc] sm:$0xf]
  %v1131 = vld [vmem:[%s7 + $0x10] sm:$0xf]
  %v1132 = vld [vmem:[%s7 + $0x14] sm:$0xf]
  %v1133 = vld [vmem:[%s7 + $0x18] sm:$0xf]
  %v1134 = vld [vmem:[%s7 + $0x1c] sm:$0xf]
  %v1135 = vld [vmem:[%s7 + $0x20] sm:$0xf]
  %v1136 = vld [vmem:[%s7 + $0x24] sm:$0xf]
  %v1137 = vld [vmem:[%s7 + $0x28] sm:$0xf]
  %v1138 = vld [vmem:[%s7 + $0x2c] sm:$0xf]
  %v1139 = vld [vmem:[%s7 + $0x30] sm:$0xf]
  %v1140 = vld [vmem:[%s7 + $0x34] sm:$0xf]
  %v1141 = vld [vmem:[%s7 + $0x38] sm:$0xf]
  %v1142 = vld [vmem:[%s7 + $0x3c] sm:$0xf]
  %v1143 = vld [vmem:[%s7 + $0x40] sm:$0xf]
  %v1144 = vld [vmem:[%s7 + $0x44] sm:$0xf]
  %v1145 = vld [vmem:[%s7 + $0x48] sm:$0xf]
  %v1146 = vld [vmem:[%s7 + $0x4c] sm:$0xf]
  %v1147 = vld [vmem:[%s7 + $0x50] sm:$0xf]
  %v1148 = vld [vmem:[%s7 + $0x54] sm:$0xf]
  %v1149 = vld [vmem:[%s7 + $0x58] sm:$0xf]
  %v1150 = vld [vmem:[%s7 + $0x5c] sm:$0xf]
  %v1151 = vld [vmem:[%s7 + $0x60] sm:$0xf]
  %v1152 = vld [vmem:[%s7 + $0x64] sm:$0xf]
  %v1153 = vld [vmem:[%s7 + $0x68] sm:$0xf]
  %v1154 = vld [vmem:[%s7 + $0x6c] sm:$0xf]
  %v1155 = vld [vmem:[%s7 + $0x70] sm:$0xf]
  %v1156 = vld [vmem:[%s7 + $0x74] sm:$0xf]
  %v1157 = vld [vmem:[%s7 + $0x78] sm:$0xf]
  %v1158 = vld [vmem:[%s7 + $0x7c] sm:$0xf]
  %v1191 = vunpack.c.l.b16 %v1127
  %v1192 = vunpack.c.l.b16 %v1128
  %v1193 = vunpack.c.l.b16 %v1129
  %v1194 = vunpack.c.l.b16 %v1130
  %v1195 = vunpack.c.l.b16 %v1131
  %v1196 = vunpack.c.l.b16 %v1132
  %v1197 = vunpack.c.l.b16 %v1133
  %v1198 = vunpack.c.l.b16 %v1134
  %v1199 = vunpack.c.l.b16 %v1135
  %v1200 = vunpack.c.l.b16 %v1136
  %v1201 = vunpack.c.l.b16 %v1137
  %v1202 = vunpack.c.l.b16 %v1138
  %v1203 = vunpack.c.l.b16 %v1139
  %v1204 = vunpack.c.l.b16 %v1140
  %v1205 = vunpack.c.l.b16 %v1141
  %v1206 = vunpack.c.l.b16 %v1142
  %v1207 = vunpack.c.l.b16 %v1143
  %v1208 = vunpack.c.l.b16 %v1144
  %v1209 = vunpack.c.l.b16 %v1145
  %v1210 = vunpack.c.l.b16 %v1146
  %v1211 = vunpack.c.l.b16 %v1147
  %v1212 = vunpack.c.l.b16 %v1148
  %v1213 = vunpack.c.l.b16 %v1149
  %v1214 = vunpack.c.l.b16 %v1150
  %v1215 = vunpack.c.l.b16 %v1151
  %v1216 = vunpack.c.l.b16 %v1152
  %v1217 = vunpack.c.l.b16 %v1153
  %v1218 = vunpack.c.l.b16 %v1154
  %v1219 = vunpack.c.l.b16 %v1155
  %v1220 = vunpack.c.l.b16 %v1156
  %v1221 = vunpack.c.l.b16 %v1157
  %v1222 = vunpack.c.l.b16 %v1158
  %v1223 = vpack.c.b16 %v1192, %v1191
  %v1224 = vpack.c.b16 %v1194, %v1193
  %v1225 = vpack.c.b16 %v1196, %v1195
  %v1226 = vpack.c.b16 %v1198, %v1197
  %v1227 = vpack.c.b16 %v1200, %v1199
  %v1228 = vpack.c.b16 %v1202, %v1201
  %v1229 = vpack.c.b16 %v1204, %v1203
  %v1230 = vpack.c.b16 %v1206, %v1205
  %v1231 = vpack.c.b16 %v1208, %v1207
  %v1232 = vpack.c.b16 %v1210, %v1209
  %v1233 = vpack.c.b16 %v1212, %v1211
  %v1234 = vpack.c.b16 %v1214, %v1213
  %v1235 = vpack.c.b16 %v1216, %v1215
  %v1236 = vpack.c.b16 %v1218, %v1217
  %v1237 = vpack.c.b16 %v1220, %v1219
  %v1238 = vpack.c.b16 %v1222, %v1221
  %1255 = vmatprep.subr.bf16.mxu0 0
  %1256 = vmatpush1.bf16.msra.mxu0 %v1230
  %1257 = vmatprep.subr.bf16.mxu0 0
  %1258 = vmatpush1.bf16.msra.mxu0 %v1229
  %1259 = vmatprep.subr.bf16.mxu0 0
  %1260 = vmatpush1.bf16.msra.mxu0 %v1228
  %1261 = vmatprep.subr.bf16.mxu0 0
  %1262 = vmatpush1.bf16.msra.mxu0 %v1227
  %1263 = vmatprep.subr.bf16.mxu0 0
  %1264 = vmatpush1.bf16.msra.mxu0 %v1226
  %1265 = vmatprep.subr.bf16.mxu0 0
  %1266 = vmatpush1.bf16.msra.mxu0 %v1225
  %1267 = vmatprep.subr.bf16.mxu0 0
  %1268 = vmatpush1.bf16.msra.mxu0 %v1224
  %1269 = vmatprep.subr.bf16.mxu0 0
  %1270 = vmatpush1.bf16.msra.mxu0 %v1223
  %1271 = vmatprep.subr.bf16.mxu0 0
  %1272 = vmatpush2.bf16.msra.mxu0 %v1238
  %1273 = vmatprep.subr.bf16.mxu0 0
  %1274 = vmatpush2.bf16.msra.mxu0 %v1237
  %1275 = vmatprep.subr.bf16.mxu0 0
  %1276 = vmatpush2.bf16.msra.mxu0 %v1236
  %1277 = vmatprep.subr.bf16.mxu0 0
  %1278 = vmatpush2.bf16.msra.mxu0 %v1235
  %1279 = vmatprep.subr.bf16.mxu0 0
  %1280 = vmatpush2.bf16.msra.mxu0 %v1234
  %1281 = vmatprep.subr.bf16.mxu0 0
  %1282 = vmatpush2.bf16.msra.mxu0 %v1233
  %1283 = vmatprep.subr.bf16.mxu0 0
  %1284 = vmatpush2.bf16.msra.mxu0 %v1232
  %1285 = vmatprep.subr.bf16.mxu0 0
  %1286 = vmatpush2.bf16.msra.mxu0 %v1231
  %1287 = vmatprep.mubr.bf16.mxu0 %v1091
  %1288 = vmatmul.mubr.bf16.gmra.mxu0 %v1090
  %v1289 = vpop.f32.mrf.mxu0
  %v1290 = vadd.f32 0.0, %v1289
  %v1291 = vpop.f32.mrf.mxu0
  %v1292 = vpop.f32.mrf.mxu0
  %v1293 = vadd.f32 0.0, %v1292
  %v1294 = vpop.f32.mrf.mxu0
  %1295 = vmatprep.mubr.bf16.mxu0 %v1093
  %1296 = vmatmul.mubr.bf16.gmra.mxu0 %v1092
  %v1297 = vpop.f32.mrf.mxu0
  %v1298 = vadd.f32 0.0, %v1297
  %v1299 = vpop.f32.mrf.mxu0
  %v1300 = vpop.f32.mrf.mxu0
  %v1301 = vpop.f32.mrf.mxu0
  %1302 = vdwg.mxu0
  %v1335 = vunpack.c.l.b16 %v1095
  %v1336 = vunpack.c.l.b16 %v1096
  %v1337 = vunpack.c.l.b16 %v1097
  %v1338 = vunpack.c.l.b16 %v1098
  %v1339 = vunpack.c.l.b16 %v1099
  %v1340 = vunpack.c.l.b16 %v1100
  %v1341 = vunpack.c.l.b16 %v1101
  %v1342 = vunpack.c.l.b16 %v1102
  %v1343 = vunpack.c.l.b16 %v1103
  %v1344 = vunpack.c.l.b16 %v1104
  %v1345 = vunpack.c.l.b16 %v1105
  %v1346 = vunpack.c.l.b16 %v1106
  %v1347 = vunpack.c.l.b16 %v1107
  %v1348 = vunpack.c.l.b16 %v1108
  %v1349 = vunpack.c.l.b16 %v1109
  %v1350 = vunpack.c.l.b16 %v1110
  %v1351 = vunpack.c.l.b16 %v1111
  %v1352 = vunpack.c.l.b16 %v1112
  %v1353 = vunpack.c.l.b16 %v1113
  %v1354 = vunpack.c.l.b16 %v1114
  %v1355 = vunpack.c.l.b16 %v1115
  %v1356 = vunpack.c.l.b16 %v1116
  %v1357 = vunpack.c.l.b16 %v1117
  %v1358 = vunpack.c.l.b16 %v1118
  %v1359 = vunpack.c.l.b16 %v1119
  %v1360 = vunpack.c.l.b16 %v1120
  %v1361 = vunpack.c.l.b16 %v1121
  %v1362 = vunpack.c.l.b16 %v1122
  %v1363 = vunpack.c.l.b16 %v1123
  %v1364 = vunpack.c.l.b16 %v1124
  %v1365 = vunpack.c.l.b16 %v1125
  %v1366 = vunpack.c.l.b16 %v1126
  %v1367 = vpack.c.b16 %v1336, %v1335
  %v1368 = vpack.c.b16 %v1338, %v1337
  %v1369 = vpack.c.b16 %v1340, %v1339
  %v1370 = vpack.c.b16 %v1342, %v1341
  %v1371 = vpack.c.b16 %v1344, %v1343
  %v1372 = vpack.c.b16 %v1346, %v1345
  %v1373 = vpack.c.b16 %v1348, %v1347
  %v1374 = vpack.c.b16 %v1350, %v1349
  %v1375 = vpack.c.b16 %v1352, %v1351
  %v1376 = vpack.c.b16 %v1354, %v1353
  %v1377 = vpack.c.b16 %v1356, %v1355
  %v1378 = vpack.c.b16 %v1358, %v1357
  %v1379 = vpack.c.b16 %v1360, %v1359
  %v1380 = vpack.c.b16 %v1362, %v1361
  %v1381 = vpack.c.b16 %v1364, %v1363
  %v1382 = vpack.c.b16 %v1366, %v1365
  %1399 = vmatprep.subr.bf16.mxu0 0
  %1400 = vmatpush1.bf16.msra.mxu0 %v1374
  %1401 = vmatprep.subr.bf16.mxu0 0
  %1402 = vmatpush1.bf16.msra.mxu0 %v1373
  %1403 = vmatprep.subr.bf16.mxu0 0
  %1404 = vmatpush1.bf16.msra.mxu0 %v1372
  %1405 = vmatprep.subr.bf16.mxu0 0
  %1406 = vmatpush1.bf16.msra.mxu0 %v1371
  %1407 = vmatprep.subr.bf16.mxu0 0
  %1408 = vmatpush1.bf16.msra.mxu0 %v1370
  %1409 = vmatprep.subr.bf16.mxu0 0
  %1410 = vmatpush1.bf16.msra.mxu0 %v1369
  %1411 = vmatprep.subr.bf16.mxu0 0
  %1412 = vmatpush1.bf16.msra.mxu0 %v1368
  %1413 = vmatprep.subr.bf16.mxu0 0
  %1414 = vmatpush1.bf16.msra.mxu0 %v1367
  %1415 = vmatprep.subr.bf16.mxu0 0
  %1416 = vmatpush2.bf16.msra.mxu0 %v1382
  %1417 = vmatprep.subr.bf16.mxu0 0
  %1418 = vmatpush2.bf16.msra.mxu0 %v1381
  %1419 = vmatprep.subr.bf16.mxu0 0
  %1420 = vmatpush2.bf16.msra.mxu0 %v1380
  %1421 = vmatprep.subr.bf16.mxu0 0
  %1422 = vmatpush2.bf16.msra.mxu0 %v1379
  %1423 = vmatprep.subr.bf16.mxu0 0
  %1424 = vmatpush2.bf16.msra.mxu0 %v1378
  %1425 = vmatprep.subr.bf16.mxu0 0
  %1426 = vmatpush2.bf16.msra.mxu0 %v1377
  %1427 = vmatprep.subr.bf16.mxu0 0
  %1428 = vmatpush2.bf16.msra.mxu0 %v1376
  %1429 = vmatprep.subr.bf16.mxu0 0
  %1430 = vmatpush2.bf16.msra.mxu0 %v1375
  %1431 = vmatprep.mubr.bf16.mxu0 %v1069
  %1432 = vmatmul.mubr.bf16.gmra.mxu0 %v1068
  %v1433 = vpop.f32.mrf.mxu0
  %v1434 = vadd.f32 %v1290, %v1433
  %v1435 = vpop.f32.mrf.mxu0
  %v1436 = vpop.f32.mrf.mxu0
  %v1437 = vadd.f32 %v1293, %v1436
  %v1438 = vpop.f32.mrf.mxu0
  %1439 = vmatprep.mubr.bf16.mxu0 %v1071
  %1440 = vmatmul.mubr.bf16.gmra.mxu0 %v1070
  %v1441 = vpop.f32.mrf.mxu0
  %v1442 = vadd.f32 %v1298, %v1441
  %v1443 = vpop.f32.mrf.mxu0
  %v1444 = vpop.f32.mrf.mxu0
  %v1445 = vpop.f32.mrf.mxu0
  %1446 = vdwg.mxu0
  %v1447 = vlaneseq
  %v1448 = vshrl.u32 %v1447, 7
  %v1449 = vsub.s32 0, %v1448
  %v1450 = vrot.slane %v1094, %v1449
  %v1451 = vmul.f32 %v1050, %v1450
  %v1452 = vmul.f32 %v1055, %v1450
  %v1453 = vmul.f32 %v1060, %v1450
  %v1454 = vadd.f32 %v1434, %v1451
  %v1455 = vadd.f32 %v1437, %v1452
  %v1456 = vadd.f32 %v1442, %v1453
  %v1457 = vlaneseq
  %v1458 = vshrl.u32 %v1457, 7
  %v1459 = vsub.s32 1, %v1458
  %v1460 = vrot.slane %v1094, %v1459
  %v1461 = vmul.f32 %v1074, %v1460
  %v1462 = vmul.f32 %v1078, %v1460
  %v1463 = vmul.f32 %v1082, %v1460
  %v1464 = vadd.f32 %v1454, %v1461
  %v1465 = vadd.f32 %v1455, %v1462
  %v1466 = vadd.f32 %v1456, %v1463
  %1467 = vst [vmem:[%s9] sm:$0xff] %v1464
  %1468 = vst [vmem:[%s9 + $0x8] sm:$0xff] %v1465
  %1469 = vst [vmem:[%s9 + $0x10] sm:$0xff] %v1466
  // Predicated region
  $region38: #{guided_moe_forward.3} parent=0 // pred_check
    _
  $region39: #{guided_moe_forward.3} parent=0 // pred_check_branch
    %1471 = sbr.rel (0) target = $region41
  $region40: #{guided_moe_forward.3} parent=0 // pred_region
    _
  $region41: #{guided_moe_forward.3} parent=0 // pred_fallthru
    _
  // Predicated region
  $region42: #{guided_moe_forward.3} parent=0 // pred_check
    _
  $region43: #{guided_moe_forward.3} parent=0 // pred_check_branch
    %1473 = sbr.rel (0) target = $region45
  $region44: #{guided_moe_forward.3} parent=0 // pred_region
    _
  $region45: #{guided_moe_forward.3} parent=0 // pred_fallthru
    _

</llo_original>
